<compile_context>
chip_gen: v6e
topology: v6e:2x2x1
jax: 0.10.0
libtpu: 0.0.40
codegen_flags: <defaults>
</compile_context>

<pallas_src>
import jax
import jax.numpy as jnp
from jax import lax
from jax.experimental import pallas as pl
from jax.experimental.pallas import tpu as pltpu

_EPS = 1e-15


def _round_up(x, m):
    return -(-x // m) * m


# --------------------------------------------------------------------------- on-chip helpers

def _tile_xy(t, thw, H, W, HW):
    """Per-tile pixel coordinates generated on-chip (no HBM const slab).

    Returns (x, y, valid), each (1, thw): x = col/(W-1), y = row/(H-1), valid = in-range mask
    for the (possibly padded) tail tile.  Exact for HW < 2**23 via float divmod + correction.
    """
    lane = lax.broadcasted_iota(jnp.int32, (1, thw), 1)
    p_i = lane + t * thw
    valid = p_i < HW
    p = p_i.astype(jnp.float32)
    q0 = jnp.floor(p * (1.0 / W))
    c0 = p - q0 * W
    q = q0 + jnp.where(c0 >= W, 1.0, 0.0) - jnp.where(c0 < 0.0, 1.0, 0.0)
    c = p - q * W
    x = c * (1.0 / max(W - 1, 1))
    y = q * (1.0 / max(H - 1, 1))
    return x, y, valid


def _const_rows(x, y, rows):
    """(rows, thw) slab built on the VPU: row0=x, row1=y, row2=ones, rest zeros."""
    sub = lax.broadcasted_iota(jnp.int32, (rows, x.shape[1]), 0)
    return jnp.where(sub == 0, x,
                     jnp.where(sub == 1, y,
                               jnp.where(sub == 2, 1.0, 0.0)))


def _tile_onehot(tgt_row, n_cls, dtype):
    """(n_cls, thw) one-hot built on-chip from the int32 target lane row."""
    cls = lax.broadcasted_iota(jnp.int32, (n_cls, tgt_row.shape[1]), 0)
    return (cls == tgt_row).astype(dtype)


def _sum_all(x):
    """Full reduce to (1, 1) via two single-axis reductions (lane, then sublane)."""
    return jnp.sum(jnp.sum(x, axis=1, keepdims=True), axis=0, keepdims=True)


# --------------------------------------------------------------------------- mse (single pass)

def _make_mse_kernel(n_lab, H, W, HW, thw, needs_mask):
    def kernel(sims_ref, feat_ref, sp_ref, cx_ref, cy_ref,
               projc, projf, gram, fsq):
        t = pl.program_id(1)
        last = pl.num_programs(1) - 1

        @pl.when(t == 0)
        def _init():
            projc[...] = jnp.zeros_like(projc)
            projf[...] = jnp.zeros_like(projf)
            gram[...] = jnp.zeros_like(gram)
            fsq[...] = jnp.zeros_like(fsq)

        sims = sims_ref[0]                                   # (S, thw)
        feat = feat_ref[0]                                   # (n_lab, thw)
        x, y, valid = _tile_xy(t, thw, H, W, HW)
        cst = _const_rows(x, y, 8).astype(sims.dtype)        # [x, y, 1, 0*5]
        if needs_mask:
            # jnp.where (not *) so NaN/Inf garbage in the padded tail cannot leak in.
            sims = jnp.where(valid, sims, jnp.zeros((), sims.dtype))
            feat = jnp.where(valid, feat, jnp.zeros((), feat.dtype))

        dn = (((1,), (1,)), ((), ()))                        # contract pixel (lane) axis
        gram[...] += lax.dot_general(sims, sims, dn, preferred_element_type=jnp.float32)
        projc[...] += lax.dot_general(sims, cst, dn, preferred_element_type=jnp.float32)
        projf[...] += lax.dot_general(sims, feat, dn, preferred_element_type=jnp.float32)
        ff = feat.astype(jnp.float32)
        fsq[...] += _sum_all(ff * ff)

        @pl.when(t == last)
        def _finalize():
            # Deferred normalization: row sums come from the ones column of projc (MXU-derived).
            inv = 1.0 / projc[:, 2:3]                        # (S, 1)
            pnc = projc[...] * inv                           # (S, 8)
            pnf = projf[...] * inv                           # (S, n_lab)
            g = gram[...]
            gc = jnp.dot(g, pnc, preferred_element_type=jnp.float32)   # (S, 8)
            gf = jnp.dot(g, pnf, preferred_element_type=jnp.float32)   # (S, n_lab)
            lin_c = jnp.sum(pnc * projc[...], axis=0, keepdims=True)   # (1, 8)
            quad_c = jnp.sum(pnc * gc, axis=0, keepdims=True)          # (1, 8)
            lin_f = _sum_all(pnf * projf[...])                         # (1, 1)
            quad_f = _sum_all(pnf * gf)                                # (1, 1)
            sp = fsq[...] - 2.0 * lin_f + quad_f                       # ||F - F_sp||^2
            cx = quad_c[:, 0:1] - 2.0 * lin_c[:, 0:1]                  # + sum(x^2) in wrapper
            cy = quad_c[:, 1:2] - 2.0 * lin_c[:, 1:2]                  # + sum(y^2) in wrapper
            sp_ref[0] = jnp.broadcast_to(sp, (8, 128))
            cx_ref[0] = jnp.broadcast_to(cx, (8, 128))
            cy_ref[0] = jnp.broadcast_to(cy, (8, 128))

    return kernel


# --------------------------------------------------------------------------- cross (two pass)

def _make_cross_kernel(n_cls, H, W, HW, thw, needs_mask):
    CP = 8 + n_cls + 1          # pn columns: [x y 1 0*5 | classes | class-total]

    def kernel(sims_ref, tgt_ref, sp_ref, cx_ref, cy_ref,
               projc, projf, pn_buf, sp_acc, cx_acc, cy_acc):
        p = pl.program_id(1)    # 0: projection pass, 1: back-projection pass
        t = pl.program_id(2)
        last = pl.num_programs(2) - 1
        sims = sims_ref[0]                                   # (S, thw)
        tgt = tgt_ref[0]                                     # (1, thw) int32

        @pl.when(jnp.logical_and(p == 0, t == 0))
        def _init():
            projc[...] = jnp.zeros_like(projc)
            projf[...] = jnp.zeros_like(projf)
            sp_acc[...] = jnp.zeros_like(sp_acc)
            cx_acc[...] = jnp.zeros_like(cx_acc)
            cy_acc[...] = jnp.zeros_like(cy_acc)

        x, y, valid = _tile_xy(t, thw, H, W, HW)

        @pl.when(p == 0)
        def _project():
            s = sims
            if needs_mask:
                s = jnp.where(valid, s, jnp.zeros((), s.dtype))
            cst = _const_rows(x, y, 8).astype(s.dtype)
            oh = _tile_onehot(tgt, n_cls, s.dtype)           # on-chip one-hot (no HBM one-hot)
            dn = (((1,), (1,)), ((), ()))
            projc[...] += lax.dot_general(s, cst, dn, preferred_element_type=jnp.float32)
            projf[...] += lax.dot_general(s, oh, dn, preferred_element_type=jnp.float32)

        @pl.when(p == 1)
        def _backproject():
            @pl.when(t == 0)
            def _normalize():
                inv = 1.0 / projc[:, 2:3]
                pnc = projc[...] * inv
                pnf = projf[...] * inv
                pn_buf[:, 0:8] = pnc
                pn_buf[:, 8:8 + n_cls] = pnf
                pn_buf[:, 8 + n_cls:CP] = jnp.sum(pnf, axis=1, keepdims=True)

            pn = pn_buf[...].astype(sims.dtype)              # (S, CP), tiny
            # bp (CP, thw) = pn^T @ sims: only the tiny pn is transposed, sims never is.
            bp = lax.dot_general(pn, sims, (((0,), (0,)), ((), ())),
                                 preferred_element_type=jnp.float32)

            ex = x - bp[0:1, :]
            ey = y - bp[1:2, :]
            oh = _tile_onehot(tgt, n_cls, jnp.float32)
            picked = jnp.sum(oh * bp[8:8 + n_cls, :], axis=0, keepdims=True)   # p_tgt
            total = bp[8 + n_cls:CP, :]                                        # sum_c p_c
            # CE vs one-hot target: logsumexp_c log(p_c+eps) == log(sum_c p_c + C*eps)
            term = jnp.log(total + n_cls * _EPS) - jnp.log(picked + _EPS)
            ex2 = ex * ex
            ey2 = ey * ey
            if needs_mask:
                zero = jnp.zeros((), jnp.float32)
                ex2 = jnp.where(valid, ex2, zero)
                ey2 = jnp.where(valid, ey2, zero)
                term = jnp.where(valid, term, zero)
            cx_acc[...] += jnp.sum(ex2, axis=1, keepdims=True)
            cy_acc[...] += jnp.sum(ey2, axis=1, keepdims=True)
            sp_acc[...] += jnp.sum(term, axis=1, keepdims=True)

            @pl.when(t == last)
            def _flush():
                sp_ref[0] = jnp.broadcast_to(sp_acc[...], (8, 128))
                cx_ref[0] = jnp.broadcast_to(cx_acc[...], (8, 128))
                cy_ref[0] = jnp.broadcast_to(cy_acc[...], (8, 128))

    return kernel


# --------------------------------------------------------------------------- wrapper

def _pick_hw_tile(HW, per_pixel_bytes, max_bytes=16 << 20):
    """HW tile: multiple of 128 (masked tail allowed) or the full row, within ~max_bytes."""
    if HW <= 128 or HW * per_pixel_bytes <= max_bytes:
        return HW
    budget = max(128, max_bytes // per_pixel_bytes)
    budget = min(budget, HW)
    pad_tile = max(128, (budget // 128) * 128)
    div_tile = 0
    d = 128
    while d <= budget:                       # prefer an exact divisor (no tail masking)
        if HW % d == 0:
            div_tile = d
        d += 128
    if div_tile >= max(pad_tile // 2, 128):
        return div_tile
    return pad_tile                          # padded tail, masked in-kernel


def superpixel_loss(labels, sims, loss_type='mse', compat_coeff=1.0,
                    num_classes=None, compute_dtype=jnp.float32,
                    hw_tile_bytes=16 << 20):
    """Pallas implementation of SuperpixelLoss.forward."""
    assert loss_type in ('cross', 'mse')
    B, F_, H, W = labels.shape
    HW = H * W
    if sims.ndim == 5:                        # 'b h w hs ws -> b (hs ws) (h w)'
        b_, h_, w_, hs_, ws_ = sims.shape
        sims = jnp.transpose(sims, (0, 3, 4, 1, 2)).reshape(b_, hs_ * ws_, h_ * w_)
    S = sims.shape[1]
    assert sims.shape == (B, S, HW)

    cdt = jnp.dtype(compute_dtype)
    sims = sims.astype(cdt)

    if loss_type == 'cross':
        if num_classes is None:
            # TODO(synk): torch one_hot() infers width from the data (device->host sync);
            # pass num_classes explicitly to stay jit-compatible.
            num_classes = int(jnp.max(labels[:, 0])) + 1
        n_lab = int(num_classes)
        feat = labels[:, 0].reshape(B, 1, HW).astype(jnp.int32)   # int32 targets only in HBM
        per_pixel = 2 * S * cdt.itemsize + 2 * 4
    else:
        n_lab = F_
        feat = labels.reshape(B, F_, HW).astype(cdt)
        per_pixel = 2 * S * cdt.itemsize + 2 * n_lab * cdt.itemsize

    thw = _pick_hw_tile(HW, per_pixel, hw_tile_bytes)
    T = pl.cdiv(HW, thw)
    needs_mask = (HW % thw) != 0

    out_struct = jax.ShapeDtypeStruct((B, 8, 128), jnp.float32)
    S8 = _round_up(S, 8)
    if loss_type == 'mse':
        kernel = _make_mse_kernel(n_lab, H, W, HW, thw, needs_mask)
        grid = (B, T)
        in_specs = [pl.BlockSpec((1, S, thw), lambda b, t: (b, 0, t)),
                    pl.BlockSpec((1, n_lab, thw), lambda b, t: (b, 0, t))]
        out_spec = pl.BlockSpec((1, 8, 128), lambda b, t: (b, 0, 0))
        dims = ("parallel", "arbitrary")
        scratch = [pltpu.VMEM((S, 8), jnp.float32),          # raw coord projection
                   pltpu.VMEM((S, n_lab), jnp.float32),      # raw feature projection
                   pltpu.VMEM((S, S), jnp.float32),          # Gram G = sims @ sims^T
                   pltpu.VMEM((1, 1), jnp.float32)]          # sum(feat^2)
        scratch_bytes = 4 * (S8 * (128 + _round_up(n_lab, 128) + _round_up(S, 128)) + 8 * 128)
    else:
        CP = 8 + n_lab + 1
        kernel = _make_cross_kernel(n_lab, H, W, HW, thw, needs_mask)
        grid = (B, 2, T)
        in_specs = [pl.BlockSpec((1, S, thw), lambda b, p, t: (b, 0, t)),
                    pl.BlockSpec((1, 1, thw), lambda b, p, t: (b, 0, t))]
        out_spec = pl.BlockSpec((1, 8, 128), lambda b, p, t: (b, 0, 0))
        dims = ("parallel", "arbitrary", "arbitrary")
        scratch = [pltpu.VMEM((S, 8), jnp.float32),
                   pltpu.VMEM((S, n_lab), jnp.float32),
                   pltpu.VMEM((S, CP), jnp.float32),         # normalized pn (pass 1 stationary)
                   pltpu.VMEM((1, 1), jnp.float32),
                   pltpu.VMEM((1, 1), jnp.float32),
                   pltpu.VMEM((1, 1), jnp.float32)]
        scratch_bytes = 4 * (S8 * (128 + _round_up(n_lab, 128) + _round_up(CP, 128))
                             + 3 * 8 * 128)

    # Scoped-VMEM budget: tile working set (already includes double-buffering) + scratch +
    # outputs + headroom, capped well below v7x's 64 MiB physical VMEM.
    need = thw * per_pixel + scratch_bytes + 6 * 8 * 128 * 4 + (2 << 20)
    vmem_limit = int(min(56 << 20, max(32 << 20, need)))

    sp_t, cx_t, cy_t = pl.pallas_call(
        kernel,
        out_shape=(out_struct, out_struct, out_struct),
        grid_spec=pltpu.PrefetchScalarGridSpec(
            num_scalar_prefetch=0,
            grid=grid,
            in_specs=in_specs,
            out_specs=(out_spec, out_spec, out_spec),
            scratch_shapes=scratch),
        compiler_params=pltpu.CompilerParams(
            dimension_semantics=dims,
            vmem_limit_bytes=vmem_limit),
    )(sims, feat)

    sp_sum = jnp.sum(sp_t[:, 0, 0])
    cx_sum = jnp.sum(cx_t[:, 0, 0])
    cy_sum = jnp.sum(cy_t[:, 0, 0])

    if loss_type == 'mse':
        # Closed-form sum(x^2)/sum(y^2) constants (kernel returns quad - 2*lin only).
        wden = float(max(W - 1, 1))
        hden = float(max(H - 1, 1))
        sum_x2 = H * ((W - 1) * W * (2 * W - 1) / 6.0) / (wden * wden)
        sum_y2 = W * ((H - 1) * H * (2 * H - 1) / 6.0) / (hden * hden)
        cx_sum = cx_sum + B * sum_x2
        cy_sum = cy_sum + B * sum_y2
        sp_loss = sp_sum / (B * HW * n_lab)
    else:
        sp_loss = sp_sum / (B * HW)

    compact_loss = (cx_sum / (B * HW) + cy_sum / (B * HW)) / 2.0
    # TODO(synk): torch isnan print+exit() host side effect not reproduced.
    return sp_loss + float(compat_coeff) * compact_loss


# --------------------------------------------------------------------------- pure-JAX reference

def _coord_rows_host(H, W):
    wden = float(max(W - 1, 1))
    hden = float(max(H - 1, 1))
    HW = H * W
    ix = jnp.broadcast_to(jnp.arange(W, dtype=jnp.float32) / wden, (H, W)).reshape(HW)
    iy = jnp.broadcast_to((jnp.arange(H, dtype=jnp.float32) / hden)[:, None], (H, W)).reshape(HW)
    return ix, iy


def reference_loss(labels, sims, loss_type, compat_coeff, num_classes=None):
    """Pure-JAX reference mirroring the PyTorch forward."""
    B, F_, H, W = labels.shape
    HW = H * W
    sims = sims.astype(jnp.float32)
    sims_nmz = sims / jnp.sum(sims, axis=-1, keepdims=True)
    simsT = jnp.swapaxes(sims, -1, -2)
    labels_flat = labels.reshape(B, F_, HW)

    if loss_type == 'cross':
        tgt = labels_flat[:, 0].astype(jnp.int32)
        n_cls = int(num_classes) if num_classes is not None else int(jnp.max(tgt)) + 1
        lab = jax.nn.one_hot(tgt, n_cls, dtype=jnp.float32)
    else:
        lab = jnp.transpose(labels_flat, (0, 2, 1))

    lab_sp = simsT @ (sims_nmz @ lab)

    if loss_type == 'cross':
        logp = jax.nn.log_softmax(jnp.log(lab_sp + _EPS), axis=-1)
        picked = jnp.take_along_axis(logp, tgt[..., None], axis=-1)[..., 0]
        sp_loss = -jnp.mean(picked)
    else:
        sp_loss = jnp.mean((lab - lab_sp) ** 2)

    ix, iy = _coord_rows_host(H, W)
    ix = jnp.broadcast_to(ix[None], (B, HW))
    iy = jnp.broadcast_to(iy[None], (B, HW))
    ix_sp = (simsT @ (sims_nmz @ ix[..., None]))[..., 0]
    iy_sp = (simsT @ (sims_nmz @ iy[..., None]))[..., 0]
    compact = (jnp.mean((ix_sp - ix) ** 2) + jnp.mean((iy_sp - iy) ** 2)) / 2.0
    return sp_loss + float(compat_coeff) * compact


if __name__ == "__main__":
    key = jax.random.PRNGKey(0)
    k1, k2, k3, k4, k5 = jax.random.split(key, 5)

    def check(name, got, want, tol=1e-4):
        got = float(got)
        want = float(want)
        assert abs(got - want) <= tol * (abs(want) + 1e-6), (name, got, want)

    # --- case 1: mse, single tile -------------------------------------------------------
    B, F_, H, W = 2, 4, 16, 16
    S = 16
    HW = H * W
    compat = 0.5
    sims = jax.random.uniform(k2, (B, S, HW), jnp.float32, minval=0.1, maxval=1.0)
    labels_mse = jax.random.normal(k1, (B, F_, H, W), jnp.float32)
    out = jax.block_until_ready(superpixel_loss(labels_mse, sims, 'mse', compat))
    check('mse', out, reference_loss(labels_mse, sims, 'mse', compat))

    # --- case 2: cross, single tile -----------------------------------------------------
    n_cls = 5
    tgt = jax.random.randint(k3, (B, H, W), 0, n_cls)
    labels_cross = jnp.zeros((B, F_, H, W), jnp.float32).at[:, 0].set(tgt.astype(jnp.float32))
    out = jax.block_until_ready(
        superpixel_loss(labels_cross, sims, 'cross', compat, num_classes=n_cls))
    check('cross', out,
          reference_loss(labels_cross, sims, 'cross', compat, num_classes=n_cls))

    # --- case 3: cross, forced HW tiling (2 tiles, exact divisor) -----------------------
    out = jax.block_until_ready(
        superpixel_loss(labels_cross, sims, 'cross', compat, num_classes=n_cls,
                        hw_tile_bytes=(2 * S * 4 + 2 * 4) * 128))
    check('cross_tiled', out,
          reference_loss(labels_cross, sims, 'cross', compat, num_classes=n_cls))

    # --- case 4: mse, forced tiling with a masked (padded) tail tile --------------------
    B2, F2, H2, W2, S2 = 2, 3, 10, 20, 8
    sims2 = jax.random.uniform(k4, (B2, S2, H2 * W2), jnp.float32, minval=0.1, maxval=1.0)
    labels2 = jax.random.normal(k5, (B2, F2, H2, W2), jnp.float32)
    out = jax.block_until_ready(
        superpixel_loss(labels2, sims2, 'mse', compat,
                        hw_tile_bytes=(2 * S2 * 4 + 2 * F2 * 4) * 128))
    check('mse_masked_tail', out, reference_loss(labels2, sims2, 'mse', compat))

    print("KERNEL_OK")
</pallas_src>

<mosaic_0001>
module attributes {stable_mosaic.version = 11 : i64} {
  func.func @kernel(%arg0: i32, %arg1: i32, %arg2: memref<1x16x256xf32, #tpu.memory_space<vmem>>, %arg3: memref<1x4x256xf32, #tpu.memory_space<vmem>>, %arg4: memref<1x8x128xf32, #tpu.memory_space<vmem>>, %arg5: memref<1x8x128xf32, #tpu.memory_space<vmem>>, %arg6: memref<1x8x128xf32, #tpu.memory_space<vmem>>, %arg7: memref<16x8xf32, #tpu.memory_space<vmem>>, %arg8: memref<16x4xf32, #tpu.memory_space<vmem>>, %arg9: memref<16x16xf32, #tpu.memory_space<vmem>>, %arg10: memref<1x1xf32, #tpu.memory_space<vmem>>) attributes {dimension_semantics = [#tpu.dimension_semantics<parallel>, #tpu.dimension_semantics<arbitrary>], iteration_bounds = array<i64: 2, 1>, scalar_prefetch = 0 : i64, scratch_operands = 4 : i64, tpu.core_type = #tpu.core_type<tc>, window_params = [{transform_indices = @transform_0, window_bounds = array<i64: 1, 16, 256>}, {transform_indices = @transform_1, window_bounds = array<i64: 1, 4, 256>}, {transform_indices = @transform_2, window_bounds = array<i64: 1, 8, 128>}, {transform_indices = @transform_3, window_bounds = array<i64: 1, 8, 128>}, {transform_indices = @transform_4, window_bounds = array<i64: 1, 8, 128>}]} {
    %c0_i32 = arith.constant 0 : i32
    %0 = arith.cmpi eq, %arg1, %c0_i32 : i32
    %1 = arith.extui %0 : i1 to i32
    %c0_i32_0 = arith.constant 0 : i32
    %2 = arith.cmpi ne, %1, %c0_i32_0 : i32
    scf.if %2 {
      %cst_42 = arith.constant 0.000000e+00 : f32
      %76 = vector.broadcast %cst_42 : f32 to vector<16x8xf32>
      %c0_43 = arith.constant 0 : index
      %c0_44 = arith.constant 0 : index
      %77 = vector.load %arg7[%c0_43, %c0_44] : memref<16x8xf32, #tpu.memory_space<vmem>>, vector<16x8xf32>
      tpu.vector_store %arg7[%c0_43, %c0_44], %76 {strides = array<i32>} : memref<16x8xf32, #tpu.memory_space<vmem>>, vector<16x8xf32>,
      %cst_45 = arith.constant 0.000000e+00 : f32
      %78 = vector.broadcast %cst_45 : f32 to vector<16x4xf32>
      %c0_46 = arith.constant 0 : index
      %c0_47 = arith.constant 0 : index
      %79 = vector.load %arg8[%c0_46, %c0_47] : memref<16x4xf32, #tpu.memory_space<vmem>>, vector<16x4xf32>
      tpu.vector_store %arg8[%c0_46, %c0_47], %78 {strides = array<i32>} : memref<16x4xf32, #tpu.memory_space<vmem>>, vector<16x4xf32>,
      %cst_48 = arith.constant 0.000000e+00 : f32
      %80 = vector.broadcast %cst_48 : f32 to vector<16x16xf32>
      %c0_49 = arith.constant 0 : index
      %c0_50 = arith.constant 0 : index
      %81 = vector.load %arg9[%c0_49, %c0_50] : memref<16x16xf32, #tpu.memory_space<vmem>>, vector<16x16xf32>
      tpu.vector_store %arg9[%c0_49, %c0_50], %80 {strides = array<i32>} : memref<16x16xf32, #tpu.memory_space<vmem>>, vector<16x16xf32>,
      %cst_51 = arith.constant 0.000000e+00 : f32
      %82 = vector.broadcast %cst_51 : f32 to vector<1x1xf32>
      %c0_52 = arith.constant 0 : index
      %c0_53 = arith.constant 0 : index
      %83 = vector.load %arg10[%c0_52, %c0_53] : memref<1x1xf32, #tpu.memory_space<vmem>>, vector<1x1xf32>
      tpu.vector_store %arg10[%c0_52, %c0_53], %82 {strides = array<i32>} : memref<1x1xf32, #tpu.memory_space<vmem>>, vector<1x1xf32>,
    } else {
    }
    %c0 = arith.constant 0 : index
    %c0_1 = arith.constant 0 : index
    %c0_2 = arith.constant 0 : index
    %3 = vector.load %arg2[%c0, %c0_1, %c0_2] : memref<1x16x256xf32, #tpu.memory_space<vmem>>, vector<1x16x256xf32>
    %4 = vector.shape_cast %3 : vector<1x16x256xf32> to vector<16x256xf32>
    %c0_3 = arith.constant 0 : index
    %c0_4 = arith.constant 0 : index
    %c0_5 = arith.constant 0 : index
    %5 = vector.load %arg3[%c0_3, %c0_4, %c0_5] : memref<1x4x256xf32, #tpu.memory_space<vmem>>, vector<1x4x256xf32>
    %6 = vector.shape_cast %5 : vector<1x4x256xf32> to vector<4x256xf32>
    %7 = tpu.iota {dimensions = array<i32: 1>} : vector<1x256xi32>
    %c256_i32 = arith.constant 256 : i32
    %8 = arith.muli %arg1, %c256_i32 : i32
    %9 = vector.broadcast %8 : i32 to vector<1x256xi32>
    %10 = arith.addi %7, %9 : vector<1x256xi32>
    %11 = arith.sitofp %10 : vector<1x256xi32> to vector<1x256xf32>
    %cst = arith.constant 6.250000e-02 : f32
    %12 = vector.broadcast %cst : f32 to vector<1x256xf32>
    %13 = arith.mulf %11, %12 : vector<1x256xf32>
    %14 = math.floor %13 : vector<1x256xf32>
    %cst_6 = arith.constant 1.600000e+01 : f32
    %15 = vector.broadcast %cst_6 : f32 to vector<1x256xf32>
    %16 = arith.mulf %14, %15 : vector<1x256xf32>
    %17 = arith.subf %11, %16 : vector<1x256xf32>
    %cst_7 = arith.constant 1.600000e+01 : f32
    %18 = vector.broadcast %cst_7 : f32 to vector<1x256xf32>
    %19 = arith.cmpf oge, %17, %18 : vector<1x256xf32>
    %cst_8 = arith.constant 1.000000e+00 : f32
    %cst_9 = arith.constant 0.000000e+00 : f32
    %20 = vector.broadcast %cst_8 : f32 to vector<1x256xf32>
    %21 = vector.broadcast %cst_9 : f32 to vector<1x256xf32>
    %22 = arith.select %19, %20, %21 : vector<1x256xi1>, vector<1x256xf32>
    %23 = arith.addf %14, %22 : vector<1x256xf32>
    %cst_10 = arith.constant 0.000000e+00 : f32
    %24 = vector.broadcast %cst_10 : f32 to vector<1x256xf32>
    %25 = arith.cmpf olt, %17, %24 : vector<1x256xf32>
    %cst_11 = arith.constant 1.000000e+00 : f32
    %cst_12 = arith.constant 0.000000e+00 : f32
    %26 = vector.broadcast %cst_11 : f32 to vector<1x256xf32>
    %27 = vector.broadcast %cst_12 : f32 to vector<1x256xf32>
    %28 = arith.select %25, %26, %27 : vector<1x256xi1>, vector<1x256xf32>
    %29 = arith.subf %23, %28 : vector<1x256xf32>
    %cst_13 = arith.constant 1.600000e+01 : f32
    %30 = vector.broadcast %cst_13 : f32 to vector<1x256xf32>
    %31 = arith.mulf %29, %30 : vector<1x256xf32>
    %32 = arith.subf %11, %31 : vector<1x256xf32>
    %cst_14 = arith.constant 0.0666666701 : f32
    %33 = vector.broadcast %cst_14 : f32 to vector<1x256xf32>
    %34 = arith.mulf %32, %33 : vector<1x256xf32>
    %cst_15 = arith.constant 0.0666666701 : f32
    %35 = vector.broadcast %cst_15 : f32 to vector<1x256xf32>
    %36 = arith.mulf %29, %35 : vector<1x256xf32>
    %37 = tpu.iota {dimensions = array<i32: 0>} : vector<8x256xi32>
    %c0_i32_16 = arith.constant 0 : i32
    %38 = vector.broadcast %c0_i32_16 : i32 to vector<8x256xi32>
    %39 = arith.cmpi eq, %37, %38 : vector<8x256xi32>
    %c1_i32 = arith.constant 1 : i32
    %40 = vector.broadcast %c1_i32 : i32 to vector<8x256xi32>
    %41 = arith.cmpi eq, %37, %40 : vector<8x256xi32>
    %c2_i32 = arith.constant 2 : i32
    %42 = vector.broadcast %c2_i32 : i32 to vector<8x256xi32>
    %43 = arith.cmpi eq, %37, %42 : vector<8x256xi32>
    %cst_17 = arith.constant 1.000000e+00 : f32
    %cst_18 = arith.constant 0.000000e+00 : f32
    %44 = vector.broadcast %cst_17 : f32 to vector<8x256xf32>
    %45 = vector.broadcast %cst_18 : f32 to vector<8x256xf32>
    %46 = arith.select %43, %44, %45 : vector<8x256xi1>, vector<8x256xf32>
    %47 = vector.shape_cast %36 : vector<1x256xf32> to vector<1x256xf32>
    %48 = vector.broadcast %47 : vector<1x256xf32> to vector<8x256xf32>
    %49 = arith.select %41, %48, %46 : vector<8x256xi1>, vector<8x256xf32>
    %50 = vector.shape_cast %34 : vector<1x256xf32> to vector<1x256xf32>
    %51 = vector.broadcast %50 : vector<1x256xf32> to vector<8x256xf32>
    %52 = arith.select %39, %51, %49 : vector<8x256xi1>, vector<8x256xf32>
    %c0_19 = arith.constant 0 : index
    %c0_20 = arith.constant 0 : index
    %53 = vector.load %arg9[%c0_19, %c0_20] : memref<16x16xf32, #tpu.memory_space<vmem>>, vector<16x16xf32>
    %cst_21 = arith.constant dense<0.000000e+00> : vector<16x16xf32>
    %54 = tpu.matmul %4, %4, %cst_21 {dimension_numbers = #tpu.dot_dimension_numbers<[1], [1], [0], [0], [0, 0, 1, 0], [], []>} : vector<16x256xf32>, vector<16x256xf32>, vector<16x16xf32> -> vector<16x16xf32>
    %55 = arith.addf %53, %54 : vector<16x16xf32>
    %c0_22 = arith.constant 0 : index
    %c0_23 = arith.constant 0 : index
    %56 = vector.load %arg9[%c0_22, %c0_23] : memref<16x16xf32, #tpu.memory_space<vmem>>, vector<16x16xf32>
    tpu.vector_store %arg9[%c0_22, %c0_23], %55 {strides = array<i32>} : memref<16x16xf32, #tpu.memory_space<vmem>>, vector<16x16xf32>,
    %c0_24 = arith.constant 0 : index
    %c0_25 = arith.constant 0 : index
    %57 = vector.load %arg7[%c0_24, %c0_25] : memref<16x8xf32, #tpu.memory_space<vmem>>, vector<16x8xf32>
    %cst_26 = arith.constant dense<0.000000e+00> : vector<16x8xf32>
    %58 = tpu.matmul %4, %52, %cst_26 {dimension_numbers = #tpu.dot_dimension_numbers<[1], [1], [0], [0], [0, 0, 1, 0], [], []>} : vector<16x256xf32>, vector<8x256xf32>, vector<16x8xf32> -> vector<16x8xf32>
    %59 = arith.addf %57, %58 : vector<16x8xf32>
    %c0_27 = arith.constant 0 : index
    %c0_28 = arith.constant 0 : index
    %60 = vector.load %arg7[%c0_27, %c0_28] : memref<16x8xf32, #tpu.memory_space<vmem>>, vector<16x8xf32>
    tpu.vector_store %arg7[%c0_27, %c0_28], %59 {strides = array<i32>} : memref<16x8xf32, #tpu.memory_space<vmem>>, vector<16x8xf32>,
    %c0_29 = arith.constant 0 : index
    %c0_30 = arith.constant 0 : index
    %61 = vector.load %arg8[%c0_29, %c0_30] : memref<16x4xf32, #tpu.memory_space<vmem>>, vector<16x4xf32>
    %cst_31 = arith.constant dense<0.000000e+00> : vector<16x4xf32>
    %62 = tpu.matmul %4, %6, %cst_31 {dimension_numbers = #tpu.dot_dimension_numbers<[1], [1], [0], [0], [0, 0, 1, 0], [], []>} : vector<16x256xf32>, vector<4x256xf32>, vector<16x4xf32> -> vector<16x4xf32>
    %63 = arith.addf %61, %62 : vector<16x4xf32>
    %c0_32 = arith.constant 0 : index
    %c0_33 = arith.constant 0 : index
    %64 = vector.load %arg8[%c0_32, %c0_33] : memref<16x4xf32, #tpu.memory_space<vmem>>, vector<16x4xf32>
    tpu.vector_store %arg8[%c0_32, %c0_33], %63 {strides = array<i32>} : memref<16x4xf32, #tpu.memory_space<vmem>>, vector<16x4xf32>,
    %c0_34 = arith.constant 0 : index
    %c0_35 = arith.constant 0 : index
    %65 = vector.load %arg10[%c0_34, %c0_35] : memref<1x1xf32, #tpu.memory_space<vmem>>, vector<1x1xf32>
    %66 = arith.mulf %6, %6 : vector<4x256xf32>
    %cst_36 = arith.constant dense<0.000000e+00> : vector<4xf32>
    %67 = vector.multi_reduction <add>, %66, %cst_36 [1] : vector<4x256xf32> to vector<4xf32>
    %68 = vector.shape_cast %67 : vector<4xf32> to vector<4x1xf32>
    %cst_37 = arith.constant dense<0.000000e+00> : vector<1xf32>
    %69 = vector.multi_reduction <add>, %68, %cst_37 [0] : vector<4x1xf32> to vector<1xf32>
    %70 = vector.shape_cast %69 : vector<1xf32> to vector<1x1xf32>
    %71 = arith.addf %65, %70 : vector<1x1xf32>
    %c0_38 = arith.constant 0 : index
    %c0_39 = arith.constant 0 : index
    %72 = vector.load %arg10[%c0_38, %c0_39] : memref<1x1xf32, #tpu.memory_space<vmem>>, vector<1x1xf32>
    tpu.vector_store %arg10[%c0_38, %c0_39], %71 {strides = array<i32>} : memref<1x1xf32, #tpu.memory_space<vmem>>, vector<1x1xf32>,
    %c0_i32_40 = arith.constant 0 : i32
    %73 = arith.cmpi eq, %arg1, %c0_i32_40 : i32
    %74 = arith.extui %73 : i1 to i32
    %c0_i32_41 = arith.constant 0 : i32
    %75 = arith.cmpi ne, %74, %c0_i32_41 : i32
    scf.if %75 {
      %c0_42 = arith.constant 0 : index
      %c2 = arith.constant 2 : index
      %76 = vector.load %arg7[%c0_42, %c2] : memref<16x8xf32, #tpu.memory_space<vmem>>, vector<16x1xf32>
      %cst_43 = arith.constant 1.000000e+00 : f32
      %77 = vector.broadcast %cst_43 : f32 to vector<16x1xf32>
      %78 = arith.divf %77, %76 : vector<16x1xf32>
      %c0_44 = arith.constant 0 : index
      %c0_45 = arith.constant 0 : index
      %79 = vector.load %arg7[%c0_44, %c0_45] : memref<16x8xf32, #tpu.memory_space<vmem>>, vector<16x8xf32>
      %80 = vector.broadcast %78 : vector<16x1xf32> to vector<16x8xf32>
      %81 = arith.mulf %79, %80 : vector<16x8xf32>
      %c0_46 = arith.constant 0 : index
      %c0_47 = arith.constant 0 : index
      %82 = vector.load %arg8[%c0_46, %c0_47] : memref<16x4xf32, #tpu.memory_space<vmem>>, vector<16x4xf32>
      %83 = vector.broadcast %78 : vector<16x1xf32> to vector<16x4xf32>
      %84 = arith.mulf %82, %83 : vector<16x4xf32>
      %c0_48 = arith.constant 0 : index
      %c0_49 = arith.constant 0 : index
      %85 = vector.load %arg9[%c0_48, %c0_49] : memref<16x16xf32, #tpu.memory_space<vmem>>, vector<16x16xf32>
      %cst_50 = arith.constant dense<0.000000e+00> : vector<16x8xf32>
      %86 = tpu.matmul %85, %81, %cst_50 {dimension_numbers = #tpu.dot_dimension_numbers<[1], [0], [0], [1], [0, 0, 1, 1], [], []>} : vector<16x16xf32>, vector<16x8xf32>, vector<16x8xf32> -> vector<16x8xf32>
      %cst_51 = arith.constant dense<0.000000e+00> : vector<16x4xf32>
      %87 = tpu.matmul %85, %84, %cst_51 {dimension_numbers = #tpu.dot_dimension_numbers<[1], [0], [0], [1], [0, 0, 1, 1], [], []>} : vector<16x16xf32>, vector<16x4xf32>, vector<16x4xf32> -> vector<16x4xf32>
      %c0_52 = arith.constant 0 : index
      %c0_53 = arith.constant 0 : index
      %88 = vector.load %arg7[%c0_52, %c0_53] : memref<16x8xf32, #tpu.memory_space<vmem>>, vector<16x8xf32>
      %89 = arith.mulf %81, %88 : vector<16x8xf32>
      %cst_54 = arith.constant dense<0.000000e+00> : vector<8xf32>
      %90 = vector.multi_reduction <add>, %89, %cst_54 [0] : vector<16x8xf32> to vector<8xf32>
      %91 = vector.shape_cast %90 : vector<8xf32> to vector<1x8xf32>
      %92 = arith.mulf %81, %86 : vector<16x8xf32>
      %cst_55 = arith.constant dense<0.000000e+00> : vector<8xf32>
      %93 = vector.multi_reduction <add>, %92, %cst_55 [0] : vector<16x8xf32> to vector<8xf32>
      %94 = vector.shape_cast %93 : vector<8xf32> to vector<1x8xf32>
      %c0_56 = arith.constant 0 : index
      %c0_57 = arith.constant 0 : index
      %95 = vector.load %arg8[%c0_56, %c0_57] : memref<16x4xf32, #tpu.memory_space<vmem>>, vector<16x4xf32>
      %96 = arith.mulf %84, %95 : vector<16x4xf32>
      %cst_58 = arith.constant dense<0.000000e+00> : vector<16xf32>
      %97 = vector.multi_reduction <add>, %96, %cst_58 [1] : vector<16x4xf32> to vector<16xf32>
      %98 = vector.shape_cast %97 : vector<16xf32> to vector<16x1xf32>
      %cst_59 = arith.constant dense<0.000000e+00> : vector<1xf32>
      %99 = vector.multi_reduction <add>, %98, %cst_59 [0] : vector<16x1xf32> to vector<1xf32>
      %100 = vector.shape_cast %99 : vector<1xf32> to vector<1x1xf32>
      %101 = arith.mulf %84, %87 : vector<16x4xf32>
      %cst_60 = arith.constant dense<0.000000e+00> : vector<16xf32>
      %102 = vector.multi_reduction <add>, %101, %cst_60 [1] : vector<16x4xf32> to vector<16xf32>
      %103 = vector.shape_cast %102 : vector<16xf32> to vector<16x1xf32>
      %cst_61 = arith.constant dense<0.000000e+00> : vector<1xf32>
      %104 = vector.multi_reduction <add>, %103, %cst_61 [0] : vector<16x1xf32> to vector<1xf32>
      %105 = vector.shape_cast %104 : vector<1xf32> to vector<1x1xf32>
      %c0_62 = arith.constant 0 : index
      %c0_63 = arith.constant 0 : index
      %106 = vector.load %arg10[%c0_62, %c0_63] : memref<1x1xf32, #tpu.memory_space<vmem>>, vector<1x1xf32>
      %cst_64 = arith.constant 2.000000e+00 : f32
      %107 = vector.broadcast %cst_64 : f32 to vector<1x1xf32>
      %108 = arith.mulf %107, %100 : vector<1x1xf32>
      %109 = arith.subf %106, %108 : vector<1x1xf32>
      %110 = arith.addf %109, %105 : vector<1x1xf32>
      %111 = vector.extract_strided_slice %94 {offsets = [0, 0], sizes = [1, 1], strides = [1, 1]} : vector<1x8xf32> to vector<1x1xf32>
      %112 = vector.extract_strided_slice %91 {offsets = [0, 0], sizes = [1, 1], strides = [1, 1]} : vector<1x8xf32> to vector<1x1xf32>
      %cst_65 = arith.constant 2.000000e+00 : f32
      %113 = vector.broadcast %cst_65 : f32 to vector<1x1xf32>
      %114 = arith.mulf %113, %112 : vector<1x1xf32>
      %115 = arith.subf %111, %114 : vector<1x1xf32>
      %116 = vector.extract_strided_slice %94 {offsets = [0, 1], sizes = [1, 1], strides = [1, 1]} : vector<1x8xf32> to vector<1x1xf32>
      %117 = vector.extract_strided_slice %91 {offsets = [0, 1], sizes = [1, 1], strides = [1, 1]} : vector<1x8xf32> to vector<1x1xf32>
      %cst_66 = arith.constant 2.000000e+00 : f32
      %118 = vector.broadcast %cst_66 : f32 to vector<1x1xf32>
      %119 = arith.mulf %118, %117 : vector<1x1xf32>
      %120 = arith.subf %116, %119 : vector<1x1xf32>
      %121 = vector.shape_cast %110 : vector<1x1xf32> to vector<1x1xf32>
      %122 = vector.broadcast %121 : vector<1x1xf32> to vector<8x128xf32>
      %c0_67 = arith.constant 0 : index
      %c0_68 = arith.constant 0 : index
      %c0_69 = arith.constant 0 : index
      %123 = vector.load %arg4[%c0_67, %c0_68, %c0_69] : memref<1x8x128xf32, #tpu.memory_space<vmem>>, vector<1x8x128xf32>
      %124 = vector.shape_cast %123 : vector<1x8x128xf32> to vector<8x128xf32>
      %125 = vector.shape_cast %122 : vector<8x128xf32> to vector<1x8x128xf32>
      tpu.vector_store %arg4[%c0_67, %c0_68, %c0_69], %125 {strides = array<i32>} : memref<1x8x128xf32, #tpu.memory_space<vmem>>, vector<1x8x128xf32>,
      %126 = vector.shape_cast %115 : vector<1x1xf32> to vector<1x1xf32>
      %127 = vector.broadcast %126 : vector<1x1xf32> to vector<8x128xf32>
      %c0_70 = arith.constant 0 : index
      %c0_71 = arith.constant 0 : index
      %c0_72 = arith.constant 0 : index
      %128 = vector.load %arg5[%c0_70, %c0_71, %c0_72] : memref<1x8x128xf32, #tpu.memory_space<vmem>>, vector<1x8x128xf32>
      %129 = vector.shape_cast %128 : vector<1x8x128xf32> to vector<8x128xf32>
      %130 = vector.shape_cast %127 : vector<8x128xf32> to vector<1x8x128xf32>
      tpu.vector_store %arg5[%c0_70, %c0_71, %c0_72], %130 {strides = array<i32>} : memref<1x8x128xf32, #tpu.memory_space<vmem>>, vector<1x8x128xf32>,
      %131 = vector.shape_cast %120 : vector<1x1xf32> to vector<1x1xf32>
      %132 = vector.broadcast %131 : vector<1x1xf32> to vector<8x128xf32>
      %c0_73 = arith.constant 0 : index
      %c0_74 = arith.constant 0 : index
      %c0_75 = arith.constant 0 : index
      %133 = vector.load %arg6[%c0_73, %c0_74, %c0_75] : memref<1x8x128xf32, #tpu.memory_space<vmem>>, vector<1x8x128xf32>
      %134 = vector.shape_cast %133 : vector<1x8x128xf32> to vector<8x128xf32>
      %135 = vector.shape_cast %132 : vector<8x128xf32> to vector<1x8x128xf32>
      tpu.vector_store %arg6[%c0_73, %c0_74, %c0_75], %135 {strides = array<i32>} : memref<1x8x128xf32, #tpu.memory_space<vmem>>, vector<1x8x128xf32>,
    } else {
    }
    return
  }
  func.func @transform_0(%arg0: i32, %arg1: i32) -> (i32, i32, i32) {
    %c0_i32 = arith.constant 0 : i32
    %c0_i32_0 = arith.constant 0 : i32
    return %arg0, %c0_i32, %arg1 : i32, i32, i32
  }
  func.func @transform_1(%arg0: i32, %arg1: i32) -> (i32, i32, i32) {
    %c0_i32 = arith.constant 0 : i32
    %c0_i32_0 = arith.constant 0 : i32
    return %arg0, %c0_i32, %arg1 : i32, i32, i32
  }
  func.func @transform_2(%arg0: i32, %arg1: i32) -> (i32, i32, i32) {
    %c0_i32 = arith.constant 0 : i32
    %c0_i32_0 = arith.constant 0 : i32
    %c0_i32_1 = arith.constant 0 : i32
    return %arg0, %c0_i32, %c0_i32_0 : i32, i32, i32
  }
  func.func @transform_3(%arg0: i32, %arg1: i32) -> (i32, i32, i32) {
    %c0_i32 = arith.constant 0 : i32
    %c0_i32_0 = arith.constant 0 : i32
    %c0_i32_1 = arith.constant 0 : i32
    return %arg0, %c0_i32, %c0_i32_0 : i32, i32, i32
  }
  func.func @transform_4(%arg0: i32, %arg1: i32) -> (i32, i32, i32) {
    %c0_i32 = arith.constant 0 : i32
    %c0_i32_0 = arith.constant 0 : i32
    %c0_i32_1 = arith.constant 0 : i32
    return %arg0, %c0_i32, %c0_i32_0 : i32, i32, i32
  }
}

</mosaic_0001>

<llo_original>
// kernel: tpu_custom_call.1
$region0: #{tpu_custom_call.1}
  #allocation0 [shape = 'u32[]', space=smem, size = 0x4, offset = 0x4, fixed_abs, tag = 'smem constant byte address 0x4 - core index']
  #allocation1 [shape = 'u32[144,128]{1,0:T(1,128)}', space=vmem, size = 0x12000, scoped, tag = 'internal scratch']
  #allocation2 [shape = 'f32[16,8]{1,0:T(8,128)}', space=vmem, size = 0x2000, scoped, tag = 'scratch operand']
  #allocation3 [shape = 'f32[16,4]{1,0:T(8,128)}', space=vmem, size = 0x2000, scoped, tag = 'scratch operand']
  #allocation4 [shape = 'f32[16,16]{1,0:T(8,128)}', space=vmem, size = 0x2000, scoped, tag = 'scratch operand']
  #allocation5 [shape = 'f32[1,1]{1,0:T(1,128)}', space=vmem, size = 0x200, scoped, tag = 'scratch operand']
  %s0 = inlined_call_operand.hbm [shape: f32[2,16,256], index: 0, kind: input, shape index: {}]
  %s1 = inlined_call_operand.hbm [shape: f32[2,4,256], index: 1, kind: input, shape index: {}]
  %s2 = inlined_call_operand.hbm [shape: f32[2,8,128], index: 2, kind: output, shape index: {0}]
  %s3 = inlined_call_operand.hbm [shape: f32[2,8,128], index: 3, kind: output, shape index: {1}]
  %s4 = inlined_call_operand.hbm [shape: f32[2,8,128], index: 4, kind: output, shape index: {2}]
  %5 = xla_tuple %s2, %s3, %s4
  %s6 = sld [smem:[#allocation0]]
  $region73: #{tpu_custom_call.1} parent=0
    _
  %s8 = ssub.s32 1, %s6
  %s9 = scalar_select 0, %s8, %s6
  $region1: #{tpu_custom_call.1} parent=0
    #allocation6 [shape = 'u8[32768]{0}', space=vmem, size = 0x8000, scoped, tag = 'input window, operand 0']
    #allocation7 [shape = 's32[2]{0}', space=sflag, size = 0x8, scoped, tag = 'scoped memory for tpu_custom_call.1']
    #allocation8 [shape = 's32[2]{0}', space=sflag, size = 0x8, scoped, tag = 'scoped memory for tpu_custom_call.1']
    #allocation9 [shape = 'u8[8192]{0}', space=vmem, size = 0x2000, scoped, tag = 'input window, operand 1']
    #allocation10 [shape = 's32[2]{0}', space=sflag, size = 0x8, scoped, tag = 'scoped memory for tpu_custom_call.1']
    #allocation11 [shape = 'u8[8192]{0}', space=vmem, size = 0x2000, scoped, tag = 'output window, operand 0']
    #allocation12 [shape = 'u8[8192]{0}', space=vmem, size = 0x2000, scoped, tag = 'output window, operand 1']
    #allocation13 [shape = 's32[2]{0}', space=sflag, size = 0x8, scoped, tag = 'scoped memory for tpu_custom_call.1']
    #allocation14 [shape = 'u8[8192]{0}', space=vmem, size = 0x2000, scoped, tag = 'output window, operand 2']
    %10 = vsyncpa [#allocation7], 0
    %s11 = scalar_lea.sflag [#allocation7], 1
    %12 = vsyncpa %s11, 0
    %13 = vsyncpa [#allocation10], 0
    %s14 = scalar_lea.sflag [#allocation10], 1
    %15 = vsyncpa %s14, 0
    %16 = vsyncpa [#allocation8], 0
    %s17 = scalar_lea.sflag [#allocation8], 1
    %18 = vsyncpa %s17, 0
    %19 = vsyncpa [#allocation13], 0
    %s20 = scalar_lea.sflag [#allocation13], 1
    %21 = vsyncpa %s20, 0
    loop: start=0, step=1, limit=4
    $region2: #{tpu_custom_call.1} parent=1 // loop_pre_header
      _
    $region3: #{tpu_custom_call.1} parent=1 // loop_header
      %s23 = sphi 0, %s27
      %p24 = scmp.ge.s32.totalorder %s23, 4
      %s30 = sphi 0, %s42
      %s31 = sphi 0, %s38
      %s32 = sphi 0, %s30
      %s33 = sphi 0, %s31
      %s34 = sphi 0, %s32
      %s35 = sphi 0, %s33
      %s47 = sphi 0, %s49
      %s50 = sphi 0, %s47
      %s51 = sphi 0, %s50
      %s67 = sphi 0, %s51
      %s75 = sphi 0, %s77
      %s78 = sphi 0, %s75
      %s79 = sphi 0, %s78
      %s95 = sphi 0, %s79
      %s101 = sphi 0, %s103
      %s104 = sphi 0, %s101
      %s105 = sphi 0, %s104
      %s121 = sphi 0, %s105
      %s127 = sphi 0, %s129
      %s130 = sphi 0, %s127
      %s131 = sphi 0, %s130
      %s147 = sphi 0, %s131
      %s153 = sphi 0, %s155
      %s156 = sphi 0, %s153
      %s157 = sphi 0, %s156
      %s173 = sphi 0, %s157
    $region4: #{tpu_custom_call.1} parent=1 // loop_header_branch
      %26 = sbr.rel (%p24) target = $region8
    $region5: #{tpu_custom_call.1} parent=1 // loop_body
      %s28 = ssub.s32 %s23, 1
      %s29 = ssub.s32 %s23, 2
      %s36 = sadd.s32 1, %s31
      %p37 = scmp.ge.s32.totalorder %s36, 1
      %s38 = scalar_select %p37, 0, %s36
      %s39 = sadd.s32 1, %s30
      %s40 = scalar_select %p37, %s39, %s30
      %p41 = scmp.ge.s32.totalorder %s40, 2
      %s42 = scalar_select %p41, 0, %s40
      %s43 = ssub.s32 %s30, %s42
      %s44 = ssub.s32 %s31, %s38
      %s45 = sor.u32 %s43, %s44
      %p46 = scmp.eq.s32.totalorder %s45, 0
      %s48 = sadd.s32 %s47, 1
      %s49 = scalar_select %p46, %s47, %s48
      %p52 = pneg %p46
      %p53 = scmp.eq.s32.totalorder %s23, 1
      %p54 = por %p52, %p53
      %p55 = scmp.ne.s32.totalorder %s47, %s50
      %p56 = scmp.eq.s32.totalorder %s23, 0
      %p57 = por %p55, %p56
      %p58 = scmp.ne.s32.totalorder %s47, %s50
      %p59 = scmp.eq.s32.totalorder %s28, 1
      %p60 = por %p58, %p59
      %p61 = scmp.ne.s32.totalorder %s50, %s51
      %p62 = scmp.eq.s32.totalorder %s28, 0
      %p63 = por %p61, %p62
      %p64 = scmp.ne.s32.totalorder %s50, %s51
      %p65 = scmp.eq.s32.totalorder %s29, 1
      %p66 = por %p64, %p65
      %p68 = scmp.ne.s32.totalorder %s51, %s67
      %p69 = scmp.eq.s32.totalorder %s29, 0
      %p70 = por %p68, %p69
      %s71 = ssub.s32 %s30, %s42
      %s72 = ssub.s32 %s31, %s38
      %s73 = sor.u32 %s71, %s72
      %p74 = scmp.eq.s32.totalorder %s73, 0
      %s76 = sadd.s32 %s75, 1
      %s77 = scalar_select %p74, %s75, %s76
      %p80 = pneg %p74
      %p81 = scmp.eq.s32.totalorder %s23, 1
      %p82 = por %p80, %p81
      %p83 = scmp.ne.s32.totalorder %s75, %s78
      %p84 = scmp.eq.s32.totalorder %s23, 0
      %p85 = por %p83, %p84
      %p86 = scmp.ne.s32.totalorder %s75, %s78
      %p87 = scmp.eq.s32.totalorder %s28, 1
      %p88 = por %p86, %p87
      %p89 = scmp.ne.s32.totalorder %s78, %s79
      %p90 = scmp.eq.s32.totalorder %s28, 0
      %p91 = por %p89, %p90
      %p92 = scmp.ne.s32.totalorder %s78, %s79
      %p93 = scmp.eq.s32.totalorder %s29, 1
      %p94 = por %p92, %p93
      %p96 = scmp.ne.s32.totalorder %s79, %s95
      %p97 = scmp.eq.s32.totalorder %s29, 0
      %p98 = por %p96, %p97
      %s99 = ssub.s32 %s30, %s42
      %p100 = scmp.eq.s32.totalorder %s99, 0
      %s102 = sadd.s32 %s101, 1
      %s103 = scalar_select %p100, %s101, %s102
      %p106 = pneg %p100
      %p107 = scmp.eq.s32.totalorder %s23, 1
      %p108 = por %p106, %p107
      %p109 = scmp.ne.s32.totalorder %s101, %s104
      %p110 = scmp.eq.s32.totalorder %s23, 0
      %p111 = por %p109, %p110
      %p112 = scmp.ne.s32.totalorder %s101, %s104
      %p113 = scmp.eq.s32.totalorder %s28, 1
      %p114 = por %p112, %p113
      %p115 = scmp.ne.s32.totalorder %s104, %s105
      %p116 = scmp.eq.s32.totalorder %s28, 0
      %p117 = por %p115, %p116
      %p118 = scmp.ne.s32.totalorder %s104, %s105
      %p119 = scmp.eq.s32.totalorder %s29, 1
      %p120 = por %p118, %p119
      %p122 = scmp.ne.s32.totalorder %s105, %s121
      %p123 = scmp.eq.s32.totalorder %s29, 0
      %p124 = por %p122, %p123
      %s125 = ssub.s32 %s30, %s42
      %p126 = scmp.eq.s32.totalorder %s125, 0
      %s128 = sadd.s32 %s127, 1
      %s129 = scalar_select %p126, %s127, %s128
      %p132 = pneg %p126
      %p133 = scmp.eq.s32.totalorder %s23, 1
      %p134 = por %p132, %p133
      %p135 = scmp.ne.s32.totalorder %s127, %s130
      %p136 = scmp.eq.s32.totalorder %s23, 0
      %p137 = por %p135, %p136
      %p138 = scmp.ne.s32.totalorder %s127, %s130
      %p139 = scmp.eq.s32.totalorder %s28, 1
      %p140 = por %p138, %p139
      %p141 = scmp.ne.s32.totalorder %s130, %s131
      %p142 = scmp.eq.s32.totalorder %s28, 0
      %p143 = por %p141, %p142
      %p144 = scmp.ne.s32.totalorder %s130, %s131
      %p145 = scmp.eq.s32.totalorder %s29, 1
      %p146 = por %p144, %p145
      %p148 = scmp.ne.s32.totalorder %s131, %s147
      %p149 = scmp.eq.s32.totalorder %s29, 0
      %p150 = por %p148, %p149
      %s151 = ssub.s32 %s30, %s42
      %p152 = scmp.eq.s32.totalorder %s151, 0
      %s154 = sadd.s32 %s153, 1
      %s155 = scalar_select %p152, %s153, %s154
      %p158 = pneg %p152
      %p159 = scmp.eq.s32.totalorder %s23, 1
      %p160 = por %p158, %p159
      %p161 = scmp.ne.s32.totalorder %s153, %s156
      %p162 = scmp.eq.s32.totalorder %s23, 0
      %p163 = por %p161, %p162
      %p164 = scmp.ne.s32.totalorder %s153, %s156
      %p165 = scmp.eq.s32.totalorder %s28, 1
      %p166 = por %p164, %p165
      %p167 = scmp.ne.s32.totalorder %s156, %s157
      %p168 = scmp.eq.s32.totalorder %s28, 0
      %p169 = por %p167, %p168
      %p170 = scmp.ne.s32.totalorder %s156, %s157
      %p171 = scmp.eq.s32.totalorder %s29, 1
      %p172 = por %p170, %p171
      %p174 = scmp.ne.s32.totalorder %s157, %s173
      %p175 = scmp.eq.s32.totalorder %s29, 0
      %p176 = por %p174, %p175
      %p177 = scmp.le.s32.totalorder 1, %s23
      %p178 = scmp.lt.s32.totalorder %s23, 3
      %p179 = pnand %p177, %p178
      %p180 = pneg %p179
      // Predicated region
      $region9: #{tpu_custom_call.1} parent=5 // pred_check
        _
      $region10: #{tpu_custom_call.1} parent=5 // pred_check_branch
        %182 = sbr.rel (%p179) target = $region12
      $region11: #{tpu_custom_call.1} parent=5 // pred_region
        %s183 = ssub.s32 %s23, 1
      $region12: #{tpu_custom_call.1} parent=5 // pred_fallthru
        _
      %p184 = scmp.lt.s32.totalorder %s23, 2
      // Predicated region
      $region13: #{tpu_custom_call.1} parent=5 // pred_check
        %p185 = pneg %p184
      $region14: #{tpu_custom_call.1} parent=5 // pred_check_branch
        %187 = sbr.rel (%p185) target = $region16
      $region15: #{tpu_custom_call.1} parent=5 // pred_region
        // Predicated region
        $region17: #{tpu_custom_call.1} parent=15 // pred_check
          %p188 = pneg %p57
        $region18: #{tpu_custom_call.1} parent=15 // pred_check_branch
          %190 = sbr.rel (%p188) target = $region20
        $region19: #{tpu_custom_call.1} parent=15 // pred_region
          %s191 = sand.u32 %s47, 1
          %s192 = scalar_lea.sflag [#allocation7], %s191
          %s193 = sand.u32 %s47, 1
          %s194 = smul.addr %s193, 32
          %s195 = scalar_lea.vmem [#allocation6], %s194
          %s196 = smul.u32 2, %s31
          %s198 = ssub.s32 512, 512
          %199 = vsyncadd %s192, %s198
          %s200 = smul.addr %s30, 4
          %s201 = sadd.s32 %s196, %s200
          %s202 = smul.addr %s201, 128
          %s203 = scalar_lea.hbm %s0, %s202
          %s204 = sshll.u32 %s195, 4
          %s205 = int_to_ptr.vmem [resolvable:$true] %s204
          %210 = dma.hbm_to_vmem [thread:$0]  %s203, 512, %s205, %s192, 256, 256, 16
        $region20: #{tpu_custom_call.1} parent=15 // pred_fallthru
          _
        // Predicated region
        $region21: #{tpu_custom_call.1} parent=15 // pred_check
          %p211 = pneg %p85
        $region22: #{tpu_custom_call.1} parent=15 // pred_check_branch
          %213 = sbr.rel (%p211) target = $region24
        $region23: #{tpu_custom_call.1} parent=15 // pred_region
          %s214 = sand.u32 %s75, 1
          %s215 = scalar_lea.sflag [#allocation10], %s214
          %s216 = sand.u32 %s75, 1
          %s217 = smul.addr %s216, 8
          %s218 = scalar_lea.vmem [#allocation9], %s217
          %s219 = smul.u32 2, %s31
          %s221 = ssub.s32 128, 128
          %222 = vsyncadd %s215, %s221
          %s223 = smul.addr %s30, 2
          %s224 = sadd.s32 %s219, %s223
          %s225 = smul.addr %s224, 64
          %s226 = scalar_lea.hbm %s1, %s225
          %s228 = sshll.u32 %s218, 4
          %s229 = int_to_ptr.vmem [resolvable:$true] %s228
          %231 = dma.hbm_to_vmem [thread:$0]  %s226, 128, %s229, %s215
        $region24: #{tpu_custom_call.1} parent=15 // pred_fallthru
          _
      $region16: #{tpu_custom_call.1} parent=5 // pred_fallthru
        _
      %p232 = scmp.le.s32.totalorder 1, %s23
      %p233 = scmp.lt.s32.totalorder %s23, 3
      %p234 = pnand %p232, %p233
      %p235 = pneg %p234
      // Predicated region
      $region25: #{tpu_custom_call.1} parent=5 // pred_check
        _
      $region26: #{tpu_custom_call.1} parent=5 // pred_check_branch
        %237 = sbr.rel (%p234) target = $region28
      $region27: #{tpu_custom_call.1} parent=5 // pred_region
        %s238 = ssub.s32 %s23, 1
        %s239 = sand.u32 %s50, 1
        %s240 = scalar_lea.sflag [#allocation7], %s239
        %s241 = sand.u32 %s50, 1
        %s242 = smul.addr %s241, 32
        %s243 = scalar_lea.vmem [#allocation6], %s242
        // Predicated region
        $region29: #{tpu_custom_call.1} parent=27 // pred_check
          %p244 = pneg %p63
        $region30: #{tpu_custom_call.1} parent=27 // pred_check_branch
          %246 = sbr.rel (%p244) target = $region32
        $region31: #{tpu_custom_call.1} parent=27 // pred_region
          %247 = dma.done %s240, 512
        $region32: #{tpu_custom_call.1} parent=27 // pred_fallthru
          _
        %s248 = sand.u32 %s78, 1
        %s249 = scalar_lea.sflag [#allocation10], %s248
        %s250 = sand.u32 %s78, 1
        %s251 = smul.addr %s250, 8
        %s252 = scalar_lea.vmem [#allocation9], %s251
        // Predicated region
        $region33: #{tpu_custom_call.1} parent=27 // pred_check
          %p253 = pneg %p91
        $region34: #{tpu_custom_call.1} parent=27 // pred_check_branch
          %255 = sbr.rel (%p253) target = $region36
        $region35: #{tpu_custom_call.1} parent=27 // pred_region
          %256 = dma.done %s249, 128
        $region36: #{tpu_custom_call.1} parent=27 // pred_fallthru
          _
        %s257 = sand.u32 %s50, 1
        %s258 = scalar_lea.sflag [#allocation7], %s257
        %s259 = sand.u32 %s50, 1
        %s260 = smul.addr %s259, 32
        %s261 = scalar_lea.vmem [#allocation6], %s260
        %p262 = pneg %p63
        %p263 = pneg %p60
        %s264 = sand.u32 %s78, 1
        %s265 = scalar_lea.sflag [#allocation10], %s264
        %s266 = sand.u32 %s78, 1
        %s267 = smul.addr %s266, 8
        %s268 = scalar_lea.vmem [#allocation9], %s267
        %p269 = pneg %p91
        %p270 = pneg %p88
        %p271 = pneg %p117
        %p272 = pneg %p114
        %s273 = sand.u32 %s104, 1
        %s274 = scalar_lea.sflag [#allocation8], %s273
        %s275 = sand.u32 %s104, 1
        %s276 = smul.addr %s275, 8
        %s277 = scalar_lea.vmem [#allocation11], %s276
        %p278 = pneg %p143
        %p279 = pneg %p140
        %s280 = sand.u32 %s28, 1
        %s281 = scalar_lea.sflag [#allocation13], %s280
        %s282 = sand.u32 %s130, 1
        %s283 = smul.addr %s282, 8
        %s284 = scalar_lea.vmem [#allocation12], %s283
        %p285 = pneg %p169
        %p286 = pneg %p166
        %s287 = sand.u32 %s28, 1
        %s288 = scalar_lea.sflag [#allocation13], %s287
        %s289 = sand.u32 %s156, 1
        %s290 = smul.addr %s289, 8
        %s291 = scalar_lea.vmem [#allocation14], %s290
        %s292 = smul.u32 2, %s33
        %s293 = smul.u32 2, %s33
        %p294 = scmp.eq.s32.totalorder %s33, 0
        // Predicated region
        $region37: #{tpu_custom_call.1} parent=27 // pred_check
          %p295 = pneg %p294
        $region38: #{tpu_custom_call.1} parent=27 // pred_check_branch
          %297 = sbr.rel (%p295) target = $region40
        $region39: #{tpu_custom_call.1} parent=27 // pred_region
          %vm298 = vcmask 64512
          %299 = vst.msk [vmem:[#allocation2] sm:$0xff] %vm298, 0.0
          %300 = vst.msk [vmem:[#allocation2 + $0x8] sm:$0xff] %vm298, 0.0
          %vm301 = vcmask 31744
          %302 = vst.msk [vmem:[#allocation3] sm:$0xff] %vm301, 0.0
          %303 = vst.msk [vmem:[#allocation3 + $0x8] sm:$0xff] %vm301, 0.0
          %vm304 = vcmask 130048
          %305 = vst.msk [vmem:[#allocation4] sm:$0xff] %vm304, 0.0
          %306 = vst.msk [vmem:[#allocation4 + $0x8] sm:$0xff] %vm304, 0.0
          %vm307 = vcmask 0
          %308 = vst.msk [vmem:[#allocation5] sm:$0x1] %vm307, 0.0
        $region40: #{tpu_custom_call.1} parent=27 // pred_fallthru
          _
        %v309 = vld [vmem:[%s243] sm:$0xff]
        %v310 = vld [vmem:[%s243 + $0x8] sm:$0xff]
        %v311 = vld [vmem:[%s243 + $0x10] sm:$0xff]
        %v312 = vld [vmem:[%s243 + $0x18] sm:$0xff]
        %v313 = vld [vmem:[%s252] sm:$0xff]
        %v314 = vlaneseq
        %v315 = vand.u32 %v314, 127
        %v316 = vadd.s32 %v315, 128
        %s317 = smul.u32 %s33, 256
        %v318 = vstv %s317
        %v319 = vadd.s32 %v315, %v318
        %v320 = vadd.s32 %v316, %v318
        %v321 = vcvt.s32.f32 %v319
        %v322 = vcvt.s32.f32 %v320
        %v323 = vmul.f32 %v321, 0.0625
        %v324 = vmul.f32 %v322, 0.0625
        %v325 = vfloor.f32 %v323
        %v326 = vfloor.f32 %v324
        %v327 = vmul.f32 %v325, 16.0
        %v328 = vmul.f32 %v326, 16.0
        %v329 = vsub.f32 %v321, %v327
        %v330 = vsub.f32 %v322, %v328
        %vm331 = vcmp.ge.f32.partialorder %v329, 16.0
        %vm332 = vcmp.ge.f32.partialorder %v330, 16.0
        %v333 = vsel %vm331, 1.0, 0.0
        %v334 = vsel %vm332, 1.0, 0.0
        %v335 = vadd.f32 %v325, %v333
        %v336 = vadd.f32 %v326, %v334
        %vm337 = vcmp.lt.f32.partialorder %v329, 0.0
        %vm338 = vcmp.lt.f32.partialorder %v330, 0.0
        %v339 = vsel %vm337, 1.0, 0.0
        %v340 = vsel %vm338, 1.0, 0.0
        %v341 = vsub.f32 %v335, %v339
        %v342 = vsub.f32 %v336, %v340
        %v343 = vmul.f32 %v341, 16.0
        %v344 = vmul.f32 %v342, 16.0
        %v345 = vsub.f32 %v321, %v343
        %v346 = vsub.f32 %v322, %v344
        %v347 = vmul.f32 %v345, 0.06666667
        %v348 = vmul.f32 %v346, 0.06666667
        %v349 = vmul.f32 %v341, 0.06666667
        %v350 = vmul.f32 %v342, 0.06666667
        %v351 = vlaneseq
        %v352 = vshrl.u32 %v351, 7
        %vm353 = vcmp.eq.s32.totalorder %v352, 0
        %vm354 = vcmp.eq.s32.totalorder %v352, 1
        %vm355 = vcmp.eq.s32.totalorder %v352, 2
        %v356 = vsel %vm355, 1.0, 0.0
        %v357 = vsel %vm354, %v349, %v356
        %v358 = vsel %vm354, %v350, %v356
        %v359 = vsel %vm353, %v347, %v357
        %v360 = vsel %vm353, %v348, %v358
        %v361 = vld [vmem:[#allocation4] sm:$0xff]
        %v362 = vld [vmem:[#allocation4 + $0x8] sm:$0xff]
        %363 = vmatprep.subr.mxu0 0.0
        %364 = vmatpush1.xpose.msra.mxu0 0.0
        %365 = vmatprep.subr.mxu0 0.0
        %366 = vmatpush1.xpose.msra.mxu0 0.0
        %367 = vmatprep.subr.mxu0 0.0
        %368 = vmatpush1.xpose.msra.mxu0 0.0
        %369 = vmatprep.subr.mxu0 0.0
        %370 = vmatpush1.xpose.msra.mxu0 0.0
        %371 = vmatprep.subr.mxu0 0.0
        %372 = vmatpush1.xpose.msra.mxu0 0.0
        %373 = vmatprep.subr.mxu0 0.0
        %374 = vmatpush1.xpose.msra.mxu0 0.0
        %375 = vmatprep.subr.mxu0 0.0
        %376 = vmatpush1.xpose.msra.mxu0 0.0
        %377 = vmatprep.subr.mxu0 0.0
        %378 = vmatpush1.xpose.msra.mxu0 0.0
        %379 = vmatprep.subr.mxu0 0.0
        %380 = vmatpush1.xpose.msra.mxu0 0.0
        %381 = vmatprep.subr.mxu0 0.0
        %382 = vmatpush1.xpose.msra.mxu0 0.0
        %383 = vmatprep.subr.mxu0 0.0
        %384 = vmatpush1.xpose.msra.mxu0 0.0
        %385 = vmatprep.subr.mxu0 0.0
        %386 = vmatpush1.xpose.msra.mxu0 0.0
        %387 = vmatprep.subr.mxu0 0.0
        %388 = vmatpush1.xpose.msra.mxu0 0.0
        %389 = vmatprep.subr.mxu0 0.0
        %390 = vmatpush1.xpose.msra.mxu0 0.0
        %391 = vmatprep.subr.mxu0 %v312
        %392 = vmatpush1.xpose.msra.mxu0 %v311
        %393 = vmatprep.subr.mxu0 %v310
        %394 = vmatpush1.xpose.msra.mxu0 %v309
        %395 = vmatprep.subr.mxu0 0.0
        %396 = vmatpush2.xpose.msra.mxu0 0.0
        %397 = vmatprep.subr.mxu0 0.0
        %398 = vmatpush2.xpose.msra.mxu0 0.0
        %399 = vmatprep.subr.mxu0 0.0
        %400 = vmatpush2.xpose.msra.mxu0 0.0
        %401 = vmatprep.subr.mxu0 0.0
        %402 = vmatpush2.xpose.msra.mxu0 0.0
        %403 = vmatprep.subr.mxu0 0.0
        %404 = vmatpush2.xpose.msra.mxu0 0.0
        %405 = vmatprep.subr.mxu0 0.0
        %406 = vmatpush2.xpose.msra.mxu0 0.0
        %407 = vmatprep.subr.mxu0 0.0
        %408 = vmatpush2.xpose.msra.mxu0 0.0
        %409 = vmatprep.subr.mxu0 0.0
        %410 = vmatpush2.xpose.msra.mxu0 0.0
        %411 = vmatprep.subr.mxu0 0.0
        %412 = vmatpush2.xpose.msra.mxu0 0.0
        %413 = vmatprep.subr.mxu0 0.0
        %414 = vmatpush2.xpose.msra.mxu0 0.0
        %415 = vmatprep.subr.mxu0 0.0
        %416 = vmatpush2.xpose.msra.mxu0 0.0
        %417 = vmatprep.subr.mxu0 0.0
        %418 = vmatpush2.xpose.msra.mxu0 0.0
        %419 = vmatprep.subr.mxu0 0.0
        %420 = vmatpush2.xpose.msra.mxu0 0.0
        %421 = vmatprep.subr.mxu0 0.0
        %422 = vmatpush2.xpose.msra.mxu0 0.0
        %423 = vmatprep.subr.mxu0 0.0
        %424 = vmatpush2.xpose.msra.mxu0 0.0
        %425 = vmatprep.subr.mxu0 0.0
        %426 = vmatpush2.xpose.msra.mxu0 0.0
        %427 = vmatprep.mubr.f32.mxu0 %v310
        %428 = vmatmul.mubr.f32.gmra.mxu0 %v309
        %v429 = vpop.f32.mrf.mxu0
        %v430 = vadd.f32 0.0, %v429
        %v431 = vpop.f32.mrf.mxu0
        %432 = vmatprep.mubr.f32.mxu0 %v312
        %433 = vmatmul.mubr.f32.gmra.mxu0 %v311
        %v434 = vpop.f32.mrf.mxu0
        %v435 = vadd.f32 0.0, %v434
        %v436 = vpop.f32.mrf.mxu0
        %437 = vdwg.mxu0
        %v438 = vadd.f32 %v361, %v430
        %v439 = vadd.f32 %v362, %v435
        %vm440 = vcmask 130048
        %441 = vst.msk [vmem:[#allocation4] sm:$0xff] %vm440, %v438
        %442 = vst.msk [vmem:[#allocation4 + $0x8] sm:$0xff] %vm440, %v439
        %v443 = vld [vmem:[#allocation2] sm:$0xff]
        %v444 = vld [vmem:[#allocation2 + $0x8] sm:$0xff]
        %445 = vmatprep.subr.mxu0 0.0
        %446 = vmatpush1.xpose.msra.mxu0 0.0
        %447 = vmatprep.subr.mxu0 0.0
        %448 = vmatpush1.xpose.msra.mxu0 0.0
        %449 = vmatprep.subr.mxu0 0.0
        %450 = vmatpush1.xpose.msra.mxu0 0.0
        %451 = vmatprep.subr.mxu0 0.0
        %452 = vmatpush1.xpose.msra.mxu0 0.0
        %453 = vmatprep.subr.mxu0 0.0
        %454 = vmatpush1.xpose.msra.mxu0 0.0
        %455 = vmatprep.subr.mxu0 0.0
        %456 = vmatpush1.xpose.msra.mxu0 0.0
        %457 = vmatprep.subr.mxu0 0.0
        %458 = vmatpush1.xpose.msra.mxu0 0.0
        %459 = vmatprep.subr.mxu0 0.0
        %460 = vmatpush1.xpose.msra.mxu0 0.0
        %461 = vmatprep.subr.mxu0 0.0
        %462 = vmatpush1.xpose.msra.mxu0 0.0
        %463 = vmatprep.subr.mxu0 0.0
        %464 = vmatpush1.xpose.msra.mxu0 0.0
        %465 = vmatprep.subr.mxu0 0.0
        %466 = vmatpush1.xpose.msra.mxu0 0.0
        %467 = vmatprep.subr.mxu0 0.0
        %468 = vmatpush1.xpose.msra.mxu0 0.0
        %469 = vmatprep.subr.mxu0 0.0
        %470 = vmatpush1.xpose.msra.mxu0 0.0
        %471 = vmatprep.subr.mxu0 0.0
        %472 = vmatpush1.xpose.msra.mxu0 0.0
        %473 = vmatprep.subr.mxu0 0.0
        %474 = vmatpush1.xpose.msra.mxu0 0.0
        %475 = vmatprep.subr.mxu0 %v360
        %476 = vmatpush1.xpose.msra.mxu0 %v359
        %477 = vmatprep.subr.mxu0 0.0
        %478 = vmatpush2.xpose.msra.mxu0 0.0
        %479 = vmatprep.subr.mxu0 0.0
        %480 = vmatpush2.xpose.msra.mxu0 0.0
        %481 = vmatprep.subr.mxu0 0.0
        %482 = vmatpush2.xpose.msra.mxu0 0.0
        %483 = vmatprep.subr.mxu0 0.0
        %484 = vmatpush2.xpose.msra.mxu0 0.0
        %485 = vmatprep.subr.mxu0 0.0
        %486 = vmatpush2.xpose.msra.mxu0 0.0
        %487 = vmatprep.subr.mxu0 0.0
        %488 = vmatpush2.xpose.msra.mxu0 0.0
        %489 = vmatprep.subr.mxu0 0.0
        %490 = vmatpush2.xpose.msra.mxu0 0.0
        %491 = vmatprep.subr.mxu0 0.0
        %492 = vmatpush2.xpose.msra.mxu0 0.0
        %493 = vmatprep.subr.mxu0 0.0
        %494 = vmatpush2.xpose.msra.mxu0 0.0
        %495 = vmatprep.subr.mxu0 0.0
        %496 = vmatpush2.xpose.msra.mxu0 0.0
        %497 = vmatprep.subr.mxu0 0.0
        %498 = vmatpush2.xpose.msra.mxu0 0.0
        %499 = vmatprep.subr.mxu0 0.0
        %500 = vmatpush2.xpose.msra.mxu0 0.0
        %501 = vmatprep.subr.mxu0 0.0
        %502 = vmatpush2.xpose.msra.mxu0 0.0
        %503 = vmatprep.subr.mxu0 0.0
        %504 = vmatpush2.xpose.msra.mxu0 0.0
        %505 = vmatprep.subr.mxu0 0.0
        %506 = vmatpush2.xpose.msra.mxu0 0.0
        %507 = vmatprep.subr.mxu0 0.0
        %508 = vmatpush2.xpose.msra.mxu0 0.0
        %509 = vmatprep.mubr.f32.mxu0 %v310
        %510 = vmatmul.mubr.f32.gmra.mxu0 %v309
        %v511 = vpop.f32.mrf.mxu0
        %v512 = vadd.f32 0.0, %v511
        %v513 = vpop.f32.mrf.mxu0
        %514 = vmatprep.mubr.f32.mxu0 %v312
        %515 = vmatmul.mubr.f32.gmra.mxu0 %v311
        %v516 = vpop.f32.mrf.mxu0
        %v517 = vadd.f32 0.0, %v516
        %v518 = vpop.f32.mrf.mxu0
        %519 = vdwg.mxu0
        %v520 = vadd.f32 %v443, %v512
        %v521 = vadd.f32 %v444, %v517
        %vm522 = vcmask 64512
        %523 = vst.msk [vmem:[#allocation2] sm:$0xff] %vm522, %v520
        %524 = vst.msk [vmem:[#allocation2 + $0x8] sm:$0xff] %vm522, %v521
        %v525 = vld [vmem:[#allocation3] sm:$0xff]
        %v526 = vld [vmem:[#allocation3 + $0x8] sm:$0xff]
        %v528 = vcombine.high %v313, %v313
        %530 = vmatprep.subr.mxu0 0.0
        %531 = vmatpush1.xpose.msra.mxu0 0.0
        %532 = vmatprep.subr.mxu0 0.0
        %533 = vmatpush1.xpose.msra.mxu0 0.0
        %534 = vmatprep.subr.mxu0 0.0
        %535 = vmatpush1.xpose.msra.mxu0 0.0
        %536 = vmatprep.subr.mxu0 0.0
        %537 = vmatpush1.xpose.msra.mxu0 0.0
        %538 = vmatprep.subr.mxu0 0.0
        %539 = vmatpush1.xpose.msra.mxu0 0.0
        %540 = vmatprep.subr.mxu0 0.0
        %541 = vmatpush1.xpose.msra.mxu0 0.0
        %542 = vmatprep.subr.mxu0 0.0
        %543 = vmatpush1.xpose.msra.mxu0 0.0
        %544 = vmatprep.subr.mxu0 0.0
        %545 = vmatpush1.xpose.msra.mxu0 0.0
        %546 = vmatprep.subr.mxu0 0.0
        %547 = vmatpush1.xpose.msra.mxu0 0.0
        %548 = vmatprep.subr.mxu0 0.0
        %549 = vmatpush1.xpose.msra.mxu0 0.0
        %550 = vmatprep.subr.mxu0 0.0
        %551 = vmatpush1.xpose.msra.mxu0 0.0
        %552 = vmatprep.subr.mxu0 0.0
        %553 = vmatpush1.xpose.msra.mxu0 0.0
        %554 = vmatprep.subr.mxu0 0.0
        %555 = vmatpush1.xpose.msra.mxu0 0.0
        %556 = vmatprep.subr.mxu0 0.0
        %557 = vmatpush1.xpose.msra.mxu0 0.0
        %558 = vmatprep.subr.mxu0 0.0
        %559 = vmatpush1.xpose.msra.mxu0 0.0
        %560 = vmatprep.subr.mxu0 %v528
        %561 = vmatpush1.xpose.msra.mxu0 %v313
        %562 = vmatprep.subr.mxu0 0.0
        %563 = vmatpush2.xpose.msra.mxu0 0.0
        %564 = vmatprep.subr.mxu0 0.0
        %565 = vmatpush2.xpose.msra.mxu0 0.0
        %566 = vmatprep.subr.mxu0 0.0
        %567 = vmatpush2.xpose.msra.mxu0 0.0
        %568 = vmatprep.subr.mxu0 0.0
        %569 = vmatpush2.xpose.msra.mxu0 0.0
        %570 = vmatprep.subr.mxu0 0.0
        %571 = vmatpush2.xpose.msra.mxu0 0.0
        %572 = vmatprep.subr.mxu0 0.0
        %573 = vmatpush2.xpose.msra.mxu0 0.0
        %574 = vmatprep.subr.mxu0 0.0
        %575 = vmatpush2.xpose.msra.mxu0 0.0
        %576 = vmatprep.subr.mxu0 0.0
        %577 = vmatpush2.xpose.msra.mxu0 0.0
        %578 = vmatprep.subr.mxu0 0.0
        %579 = vmatpush2.xpose.msra.mxu0 0.0
        %580 = vmatprep.subr.mxu0 0.0
        %581 = vmatpush2.xpose.msra.mxu0 0.0
        %582 = vmatprep.subr.mxu0 0.0
        %583 = vmatpush2.xpose.msra.mxu0 0.0
        %584 = vmatprep.subr.mxu0 0.0
        %585 = vmatpush2.xpose.msra.mxu0 0.0
        %586 = vmatprep.subr.mxu0 0.0
        %587 = vmatpush2.xpose.msra.mxu0 0.0
        %588 = vmatprep.subr.mxu0 0.0
        %589 = vmatpush2.xpose.msra.mxu0 0.0
        %590 = vmatprep.subr.mxu0 0.0
        %591 = vmatpush2.xpose.msra.mxu0 0.0
        %592 = vmatprep.subr.mxu0 0.0
        %593 = vmatpush2.xpose.msra.mxu0 0.0
        %594 = vmatprep.mubr.f32.mxu0 %v310
        %595 = vmatmul.mubr.f32.gmra.mxu0 %v309
        %v596 = vpop.f32.mrf.mxu0
        %v597 = vadd.f32 0.0, %v596
        %v598 = vpop.f32.mrf.mxu0
        %599 = vmatprep.mubr.f32.mxu0 %v312
        %600 = vmatmul.mubr.f32.gmra.mxu0 %v311
        %v601 = vpop.f32.mrf.mxu0
        %v602 = vadd.f32 0.0, %v601
        %v603 = vpop.f32.mrf.mxu0
        %604 = vdwg.mxu0
        %v605 = vadd.f32 %v525, %v597
        %v606 = vadd.f32 %v526, %v602
        %vm607 = vcmask 31744
        %608 = vst.msk [vmem:[#allocation3] sm:$0xff] %vm607, %v605
        %609 = vst.msk [vmem:[#allocation3 + $0x8] sm:$0xff] %vm607, %v606
        %v610 = vld [vmem:[#allocation5] sm:$0x1]
        %v611 = vmul.f32 %v313, %v313
        %v613 = vcombine.high %v611, %v611
        %vm615 = vcmask 1043456
        %v616 = vsel %vm615, %v611, 0.0
        %v617 = vsel %vm615, %v613, 0.0
        %v618 = vadd.f32 %v616, %v617
        %619 = vadd.xlane.f32.xlu0 %v618
        %v620 = vpop.xlane.xlu0 %619
        %v621 = vsel %vm615, %v620, 0.0
        %v622 = vrot.slane %v621, 4
        %v623 = vadd.f32 %v621, %v622
        %v624 = vrot.slane %v623, 2
        %v625 = vadd.f32 %v623, %v624
        %v626 = vrot.slane %v625, 1
        %v627 = vadd.f32 %v625, %v626
        %v628 = vadd.f32 %v610, %v627
        %vm629 = vcmask 0
        %630 = vst.msk [vmem:[#allocation5] sm:$0x1] %vm629, %v628
        // Predicated region
        $region41: #{tpu_custom_call.1} parent=27 // pred_check
          %p631 = pneg %p294
        $region42: #{tpu_custom_call.1} parent=27 // pred_check_branch
          %633 = sbr.rel (%p631) target = $region44
        $region43: #{tpu_custom_call.1} parent=27 // pred_region
          %v634 = vld [vmem:[#allocation2] sm:$0xff]
          %v635 = vld [vmem:[#allocation2 + $0x8] sm:$0xff]
          %v636 = vrcp.pop %v634
          %v637 = vmul.f32 1.0, %v636
          %v638 = vrcp.pop %v635
          %v639 = vmul.f32 1.0, %v638
          %641 = vset.pattern.permute.xlu0 2
          %642 = vperm.xlu0 %641, %v637
          %v643 = vpop.permute.xlu0 %642
          %646 = vset.pattern.permute.xlu0 2
          %647 = vperm.xlu0 %646, %v639
          %v648 = vpop.permute.xlu0 %647
          %v650 = vmul.f32 %v634, %v643
          %v651 = vmul.f32 %v635, %v648
          %v652 = vld [vmem:[#allocation3] sm:$0xff]
          %v653 = vld [vmem:[#allocation3 + $0x8] sm:$0xff]
          %v654 = vmul.f32 %v652, %v643
          %v655 = vmul.f32 %v653, %v648
          %v656 = vld [vmem:[#allocation4] sm:$0xff]
          %v657 = vld [vmem:[#allocation4 + $0x8] sm:$0xff]
          %v659 = vsel %vm440, %v656, 0
          %v662 = vsel %vm440, %v657, 0
          %664 = vmatprep.subr.mxu0 0.0
          %665 = vmatpush1.msra.mxu0 0.0
          %666 = vmatprep.subr.mxu0 0.0
          %667 = vmatpush1.msra.mxu0 0.0
          %668 = vmatprep.subr.mxu0 0.0
          %669 = vmatpush1.msra.mxu0 0.0
          %670 = vmatprep.subr.mxu0 0.0
          %671 = vmatpush1.msra.mxu0 0.0
          %672 = vmatprep.subr.mxu0 0.0
          %673 = vmatpush1.msra.mxu0 0.0
          %674 = vmatprep.subr.mxu0 0.0
          %675 = vmatpush1.msra.mxu0 0.0
          %676 = vmatprep.subr.mxu0 0.0
          %677 = vmatpush1.msra.mxu0 0.0
          %678 = vmatprep.subr.mxu0 0.0
          %679 = vmatpush1.msra.mxu0 0.0
          %680 = vmatprep.subr.mxu0 0.0
          %681 = vmatpush1.msra.mxu0 0.0
          %682 = vmatprep.subr.mxu0 0.0
          %683 = vmatpush1.msra.mxu0 0.0
          %684 = vmatprep.subr.mxu0 0.0
          %685 = vmatpush1.msra.mxu0 0.0
          %686 = vmatprep.subr.mxu0 0.0
          %687 = vmatpush1.msra.mxu0 0.0
          %688 = vmatprep.subr.mxu0 0.0
          %689 = vmatpush1.msra.mxu0 0.0
          %690 = vmatprep.subr.mxu0 0.0
          %691 = vmatpush1.msra.mxu0 0.0
          %692 = vmatprep.subr.mxu0 0.0
          %693 = vmatpush1.msra.mxu0 %v651
          %694 = vmatprep.subr.mxu0 0.0
          %695 = vmatpush1.msra.mxu0 %v650
          %696 = vmatprep.subr.mxu0 0.0
          %697 = vmatpush2.msra.mxu0 0.0
          %698 = vmatprep.subr.mxu0 0.0
          %699 = vmatpush2.msra.mxu0 0.0
          %700 = vmatprep.subr.mxu0 0.0
          %701 = vmatpush2.msra.mxu0 0.0
          %702 = vmatprep.subr.mxu0 0.0
          %703 = vmatpush2.msra.mxu0 0.0
          %704 = vmatprep.subr.mxu0 0.0
          %705 = vmatpush2.msra.mxu0 0.0
          %706 = vmatprep.subr.mxu0 0.0
          %707 = vmatpush2.msra.mxu0 0.0
          %708 = vmatprep.subr.mxu0 0.0
          %709 = vmatpush2.msra.mxu0 0.0
          %710 = vmatprep.subr.mxu0 0.0
          %711 = vmatpush2.msra.mxu0 0.0
          %712 = vmatprep.subr.mxu0 0.0
          %713 = vmatpush2.msra.mxu0 0.0
          %714 = vmatprep.subr.mxu0 0.0
          %715 = vmatpush2.msra.mxu0 0.0
          %716 = vmatprep.subr.mxu0 0.0
          %717 = vmatpush2.msra.mxu0 0.0
          %718 = vmatprep.subr.mxu0 0.0
          %719 = vmatpush2.msra.mxu0 0.0
          %720 = vmatprep.subr.mxu0 0.0
          %721 = vmatpush2.msra.mxu0 0.0
          %722 = vmatprep.subr.mxu0 0.0
          %723 = vmatpush2.msra.mxu0 0.0
          %724 = vmatprep.subr.mxu0 0.0
          %725 = vmatpush2.msra.mxu0 0.0
          %726 = vmatprep.subr.mxu0 0.0
          %727 = vmatpush2.msra.mxu0 0.0
          %728 = vmatprep.mubr.f32.mxu0 0.0
          %729 = vmatmul.mubr.f32.gmra.mxu0 %v659
          %v730 = vpop.f32.mrf.mxu0
          %v731 = vadd.f32 0.0, %v730
          %v732 = vpop.f32.mrf.mxu0
          %733 = vmatprep.mubr.f32.mxu0 0.0
          %734 = vmatmul.mubr.f32.gmra.mxu0 %v662
          %v735 = vpop.f32.mrf.mxu0
          %v736 = vadd.f32 0.0, %v735
          %v737 = vpop.f32.mrf.mxu0
          %738 = vdwg.mxu0
          %739 = vmatprep.subr.mxu0 0.0
          %740 = vmatpush1.msra.mxu0 0.0
          %741 = vmatprep.subr.mxu0 0.0
          %742 = vmatpush1.msra.mxu0 0.0
          %743 = vmatprep.subr.mxu0 0.0
          %744 = vmatpush1.msra.mxu0 0.0
          %745 = vmatprep.subr.mxu0 0.0
          %746 = vmatpush1.msra.mxu0 0.0
          %747 = vmatprep.subr.mxu0 0.0
          %748 = vmatpush1.msra.mxu0 0.0
          %749 = vmatprep.subr.mxu0 0.0
          %750 = vmatpush1.msra.mxu0 0.0
          %751 = vmatprep.subr.mxu0 0.0
          %752 = vmatpush1.msra.mxu0 0.0
          %753 = vmatprep.subr.mxu0 0.0
          %754 = vmatpush1.msra.mxu0 0.0
          %755 = vmatprep.subr.mxu0 0.0
          %756 = vmatpush1.msra.mxu0 0.0
          %757 = vmatprep.subr.mxu0 0.0
          %758 = vmatpush1.msra.mxu0 0.0
          %759 = vmatprep.subr.mxu0 0.0
          %760 = vmatpush1.msra.mxu0 0.0
          %761 = vmatprep.subr.mxu0 0.0
          %762 = vmatpush1.msra.mxu0 0.0
          %763 = vmatprep.subr.mxu0 0.0
          %764 = vmatpush1.msra.mxu0 0.0
          %765 = vmatprep.subr.mxu0 0.0
          %766 = vmatpush1.msra.mxu0 0.0
          %767 = vmatprep.subr.mxu0 0.0
          %768 = vmatpush1.msra.mxu0 %v655
          %769 = vmatprep.subr.mxu0 0.0
          %770 = vmatpush1.msra.mxu0 %v654
          %771 = vmatprep.subr.mxu0 0.0
          %772 = vmatpush2.msra.mxu0 0.0
          %773 = vmatprep.subr.mxu0 0.0
          %774 = vmatpush2.msra.mxu0 0.0
          %775 = vmatprep.subr.mxu0 0.0
          %776 = vmatpush2.msra.mxu0 0.0
          %777 = vmatprep.subr.mxu0 0.0
          %778 = vmatpush2.msra.mxu0 0.0
          %779 = vmatprep.subr.mxu0 0.0
          %780 = vmatpush2.msra.mxu0 0.0
          %781 = vmatprep.subr.mxu0 0.0
          %782 = vmatpush2.msra.mxu0 0.0
          %783 = vmatprep.subr.mxu0 0.0
          %784 = vmatpush2.msra.mxu0 0.0
          %785 = vmatprep.subr.mxu0 0.0
          %786 = vmatpush2.msra.mxu0 0.0
          %787 = vmatprep.subr.mxu0 0.0
          %788 = vmatpush2.msra.mxu0 0.0
          %789 = vmatprep.subr.mxu0 0.0
          %790 = vmatpush2.msra.mxu0 0.0
          %791 = vmatprep.subr.mxu0 0.0
          %792 = vmatpush2.msra.mxu0 0.0
          %793 = vmatprep.subr.mxu0 0.0
          %794 = vmatpush2.msra.mxu0 0.0
          %795 = vmatprep.subr.mxu0 0.0
          %796 = vmatpush2.msra.mxu0 0.0
          %797 = vmatprep.subr.mxu0 0.0
          %798 = vmatpush2.msra.mxu0 0.0
          %799 = vmatprep.subr.mxu0 0.0
          %800 = vmatpush2.msra.mxu0 0.0
          %801 = vmatprep.subr.mxu0 0.0
          %802 = vmatpush2.msra.mxu0 0.0
          %803 = vmatprep.mubr.f32.mxu0 0.0
          %804 = vmatmul.mubr.f32.gmra.mxu0 %v659
          %v805 = vpop.f32.mrf.mxu0
          %v806 = vadd.f32 0.0, %v805
          %v807 = vpop.f32.mrf.mxu0
          %808 = vmatprep.mubr.f32.mxu0 0.0
          %809 = vmatmul.mubr.f32.gmra.mxu0 %v662
          %v810 = vpop.f32.mrf.mxu0
          %v811 = vadd.f32 0.0, %v810
          %v812 = vpop.f32.mrf.mxu0
          %813 = vdwg.mxu0
          %v814 = vmul.f32 %v650, %v634
          %v815 = vmul.f32 %v651, %v635
          %v816 = vsel %vm522, %v814, 0.0
          %v817 = vsel %vm522, %v815, 0.0
          %v818 = vadd.f32 %v816, %v817
          %v819 = vrot.slane %v818, 4
          %v820 = vadd.f32 %v818, %v819
          %v821 = vrot.slane %v820, 2
          %v822 = vadd.f32 %v820, %v821
          %v823 = vrot.slane %v822, 1
          %v824 = vadd.f32 %v822, %v823
          %v825 = vmul.f32 %v650, %v731
          %v826 = vmul.f32 %v651, %v736
          %v827 = vsel %vm522, %v825, 0.0
          %v828 = vsel %vm522, %v826, 0.0
          %v829 = vadd.f32 %v827, %v828
          %v830 = vrot.slane %v829, 4
          %v831 = vadd.f32 %v829, %v830
          %v832 = vrot.slane %v831, 2
          %v833 = vadd.f32 %v831, %v832
          %v834 = vrot.slane %v833, 1
          %v835 = vadd.f32 %v833, %v834
          %v836 = vmul.f32 %v654, %v652
          %v837 = vmul.f32 %v655, %v653
          %v838 = vsel %vm607, %v836, 0.0
          %839 = vadd.xlane.f32.xlu0 %v838
          %v840 = vpop.xlane.xlu0 %839
          %v841 = vsel %vm607, %v837, 0.0
          %842 = vadd.xlane.f32.xlu0 %v841
          %v843 = vpop.xlane.xlu0 %842
          %v844 = vadd.f32 %v840, %v843
          %v845 = vrot.slane %v844, 4
          %v846 = vadd.f32 %v844, %v845
          %v847 = vrot.slane %v846, 2
          %v848 = vadd.f32 %v846, %v847
          %v849 = vrot.slane %v848, 1
          %v850 = vadd.f32 %v848, %v849
          %v851 = vmul.f32 %v654, %v806
          %v852 = vmul.f32 %v655, %v811
          %v853 = vsel %vm607, %v851, 0.0
          %854 = vadd.xlane.f32.xlu0 %v853
          %v855 = vpop.xlane.xlu0 %854
          %v856 = vsel %vm607, %v852, 0.0
          %857 = vadd.xlane.f32.xlu0 %v856
          %v858 = vpop.xlane.xlu0 %857
          %v859 = vadd.f32 %v855, %v858
          %v860 = vrot.slane %v859, 4
          %v861 = vadd.f32 %v859, %v860
          %v862 = vrot.slane %v861, 2
          %v863 = vadd.f32 %v861, %v862
          %v864 = vrot.slane %v863, 1
          %v865 = vadd.f32 %v863, %v864
          %v866 = vld [vmem:[#allocation5] sm:$0x1]
          %v867 = vmul.f32 %v850, 2.0
          %v868 = vsub.f32 %v866, %v867
          %v869 = vadd.f32 %v868, %v865
          %v870 = vmul.f32 %v824, 2.0
          %v871 = vsub.f32 %v835, %v870
          %v873 = vlaneseq
          %v874 = vshrl.u32 %v873, 7
          %v875 = vsub.s32 0, %v874
          %v876 = vrot.slane %v869, %v875
          %877 = vset.pattern.permute.xlu0 0
          %878 = vperm.xlu0 %877, %v876
          %v879 = vpop.permute.xlu0 %878
          %881 = vst [vmem:[%s277] sm:$0xff] %v879
          %883 = vset.pattern.permute.xlu0 0
          %884 = vperm.xlu0 %883, %v871
          %v885 = vpop.permute.xlu0 %884
          %887 = vst [vmem:[%s284] sm:$0xff] %v885
          %888 = vset.pattern.permute.xlu0 1
          %889 = vperm.xlu0 %888, %v871
          %v890 = vpop.permute.xlu0 %889
          %892 = vst [vmem:[%s291] sm:$0xff] %v890
        $region44: #{tpu_custom_call.1} parent=27 // pred_fallthru
          _
        %s893 = sand.u32 %s104, 1
        %s894 = scalar_lea.sflag [#allocation8], %s893
        %s895 = sand.u32 %s104, 1
        %s896 = smul.addr %s895, 8
        %s897 = scalar_lea.vmem [#allocation11], %s896
        %s898 = sand.u32 %s28, 1
        %s899 = scalar_lea.sflag [#allocation13], %s898
        %s900 = sand.u32 %s130, 1
        %s901 = smul.addr %s900, 8
        %s902 = scalar_lea.vmem [#allocation12], %s901
        %s903 = sand.u32 %s28, 1
        %s904 = scalar_lea.sflag [#allocation13], %s903
        %s905 = sand.u32 %s156, 1
        %s906 = smul.addr %s905, 8
        %s907 = scalar_lea.vmem [#allocation14], %s906
        // Predicated region
        $region45: #{tpu_custom_call.1} parent=27 // pred_check
          %p908 = pneg %p114
        $region46: #{tpu_custom_call.1} parent=27 // pred_check_branch
          %910 = sbr.rel (%p908) target = $region48
        $region47: #{tpu_custom_call.1} parent=27 // pred_region
          %s912 = ssub.s32 128, 128
          %913 = vsyncadd %s894, %s912
          %s914 = smul.addr %s32, 128
          %s915 = scalar_lea.hbm %s2, %s914
          %s917 = sshll.u32 %s897, 4
          %s918 = int_to_ptr.vmem [resolvable:$true] %s917
          %920 = dma.vmem_to_hbm [thread:$0]  %s918, 128, %s915, %s894
        $region48: #{tpu_custom_call.1} parent=27 // pred_fallthru
          _
        // Predicated region
        $region49: #{tpu_custom_call.1} parent=27 // pred_check
          %p921 = pneg %p140
        $region50: #{tpu_custom_call.1} parent=27 // pred_check_branch
          %923 = sbr.rel (%p921) target = $region52
        $region51: #{tpu_custom_call.1} parent=27 // pred_region
          %s925 = ssub.s32 128, 128
          %926 = vsyncadd %s899, %s925
          %s927 = smul.addr %s32, 128
          %s928 = scalar_lea.hbm %s3, %s927
          %s930 = sshll.u32 %s902, 4
          %s931 = int_to_ptr.vmem [resolvable:$true] %s930
          %933 = dma.vmem_to_hbm [thread:$0]  %s931, 128, %s928, %s899
        $region52: #{tpu_custom_call.1} parent=27 // pred_fallthru
          _
        // Predicated region
        $region53: #{tpu_custom_call.1} parent=27 // pred_check
          %p934 = pneg %p166
        $region54: #{tpu_custom_call.1} parent=27 // pred_check_branch
          %936 = sbr.rel (%p934) target = $region56
        $region55: #{tpu_custom_call.1} parent=27 // pred_region
          %s938 = ssub.s32 128, 128
          %939 = vsyncadd %s904, %s938
          %s940 = smul.addr %s32, 128
          %s941 = scalar_lea.hbm %s4, %s940
          %s943 = sshll.u32 %s907, 4
          %s944 = int_to_ptr.vmem [resolvable:$true] %s943
          %946 = dma.vmem_to_hbm [thread:$0]  %s944, 128, %s941, %s904
        $region56: #{tpu_custom_call.1} parent=27 // pred_fallthru
          _
      $region28: #{tpu_custom_call.1} parent=5 // pred_fallthru
        _
      %p947 = scmp.le.s32.totalorder 2, %s23
      // Predicated region
      $region57: #{tpu_custom_call.1} parent=5 // pred_check
        %p948 = pneg %p947
      $region58: #{tpu_custom_call.1} parent=5 // pred_check_branch
        %950 = sbr.rel (%p948) target = $region60
      $region59: #{tpu_custom_call.1} parent=5 // pred_region
        %s951 = ssub.s32 %s23, 2
        // Predicated region
        $region61: #{tpu_custom_call.1} parent=59 // pred_check
          %p952 = pneg %p120
        $region62: #{tpu_custom_call.1} parent=59 // pred_check_branch
          %954 = sbr.rel (%p952) target = $region64
        $region63: #{tpu_custom_call.1} parent=59 // pred_region
          %s955 = sand.u32 %s105, 1
          %s956 = scalar_lea.sflag [#allocation8], %s955
          %s957 = sand.u32 %s105, 1
          %s958 = smul.addr %s957, 8
          %s959 = scalar_lea.vmem [#allocation11], %s958
          %960 = dma.done %s956, 128
        $region64: #{tpu_custom_call.1} parent=59 // pred_fallthru
          _
        // Predicated region
        $region65: #{tpu_custom_call.1} parent=59 // pred_check
          %p961 = pneg %p146
        $region66: #{tpu_custom_call.1} parent=59 // pred_check_branch
          %963 = sbr.rel (%p961) target = $region68
        $region67: #{tpu_custom_call.1} parent=59 // pred_region
          %s964 = sand.u32 %s29, 1
          %s965 = scalar_lea.sflag [#allocation13], %s964
          %s966 = sand.u32 %s131, 1
          %s967 = smul.addr %s966, 8
          %s968 = scalar_lea.vmem [#allocation12], %s967
          %969 = dma.done %s965, 128
        $region68: #{tpu_custom_call.1} parent=59 // pred_fallthru
          _
        // Predicated region
        $region69: #{tpu_custom_call.1} parent=59 // pred_check
          %p970 = pneg %p172
        $region70: #{tpu_custom_call.1} parent=59 // pred_check_branch
          %972 = sbr.rel (%p970) target = $region72
        $region71: #{tpu_custom_call.1} parent=59 // pred_region
          %s973 = sand.u32 %s29, 1
          %s974 = scalar_lea.sflag [#allocation13], %s973
          %s975 = sand.u32 %s157, 1
          %s976 = smul.addr %s975, 8
          %s977 = scalar_lea.vmem [#allocation14], %s976
          %978 = dma.done %s974, 128
        $region72: #{tpu_custom_call.1} parent=59 // pred_fallthru
          _
      $region60: #{tpu_custom_call.1} parent=5 // pred_fallthru
        _
    $region6: #{tpu_custom_call.1} parent=1 // loop_footer
      %s27 = sadd.s32 1, %s23
    $region7: #{tpu_custom_call.1} parent=1 // loop_footer_branch
      %22 = sbr.rel target = $region3
    $region8: #{tpu_custom_call.1} parent=1 // loop_exit
      _
    %979 = vsyncpa [#allocation7], 1
    %s980 = scalar_lea.sflag [#allocation7], 1
    %981 = vsyncpa %s980, 1
    %982 = vsyncpa [#allocation10], 1
    %s983 = scalar_lea.sflag [#allocation10], 1
    %984 = vsyncpa %s983, 1
    %985 = vsyncpa [#allocation8], 1
    %s986 = scalar_lea.sflag [#allocation8], 1
    %987 = vsyncpa %s986, 1
    %988 = vsyncpa [#allocation13], 1
    %s989 = scalar_lea.sflag [#allocation13], 1
    %990 = vsyncpa %s989, 1

</llo_original>
